<compile_context>
chip_gen: v5e
topology: v5e:2x2
jax: 0.10.0
libtpu: 0.0.40
codegen_flags: <defaults>
</compile_context>

<pallas_src>
import functools

import jax
import jax.numpy as jnp
from jax import lax
from jax.experimental import pallas as pl
from jax.experimental.pallas import tpu as pltpu


# ----------------------------- Pallas kernel -------------------------------- #
def lstm_stack_kernel(x_ref, h0_ref, c0_ref, wih_ref, whh_ref, b_ref,
                      y_ref, hT_ref, cT_ref, *, seq_len, batch, residual):
    """One grid step == one LSTM layer over the full sequence.

    x_ref   : (S*Bp, D)  flattened time-major input (consumed at layer 0 only)
    h0/c0   : (Bp, H)    initial state for layer 0
    wih_ref : (D, 4H)    fused input->gate weights, bf16, gate order [i,f,o,g]
    whh_ref : (H, 4H)    fused hidden->gate weights, bf16
    b_ref   : (1, 4H)    combined bias (b_ih + b_hh), f32
    y_ref   : (S*Bp, H)  resident output block == layer-to-layer activation carry
    hT/cT   : (Bp, H)    resident output blocks == recurrent-state carry;
                         final layer's last state on exit
    """
    layer = pl.program_id(0)
    S, Bp = seq_len, batch
    H = hT_ref.shape[-1]

    @pl.when(layer == 0)
    def _init():
        y_ref[...] = x_ref[...]          # layer-0 input becomes the carried slab
        hT_ref[...] = h0_ref[...]
        cT_ref[...] = c0_ref[...]

    # This layer's input activations (f32 snapshot; later stores to y_ref do
    # not affect it) and the hoisted input projection + bias: ONE big matmul
    # instead of S tiny ones inside the recurrence.
    xs = y_ref[...]                                            # (S*Bp, H) f32
    wih = wih_ref[...]                                         # (D, 4H) bf16
    whh = whh_ref[...]                                         # (H, 4H) bf16
    gates_x = jnp.dot(xs.astype(jnp.bfloat16), wih,
                      preferred_element_type=jnp.float32)      # (S*Bp, 4H) f32
    gates_x = gates_x + b_ref[...]                             # bias folded once

    h = hT_ref[...]                                            # (Bp, H) f32
    c = cT_ref[...]

    # TODO(synk): for long S switch to lax.fori_loop with partial unroll
    # (unroll=4/8) to bound vreg live ranges; S is tiny here, so a static
    # unrolled loop (== unroll=True) with fully static ref slices is used.
    for t in range(S):
        r0 = t * Bp                                            # sublane-aligned
        # Only the recurrent matmul is on the per-step critical path.
        gates = gates_x[r0:r0 + Bp] + jnp.dot(
            h.astype(jnp.bfloat16), whh, preferred_element_type=jnp.float32)
        # Gate order [i | f | o | g]: one wide sigmoid (3H lanes) + one tanh.
        sig = jax.nn.sigmoid(gates[:, :3 * H])
        i_g = sig[:, 0 * H:1 * H]
        f_g = sig[:, 1 * H:2 * H]
        o_g = sig[:, 2 * H:3 * H]
        g_g = jnp.tanh(gates[:, 3 * H:])
        c = f_g * c + i_g * g_g                                # f32 state
        h = o_g * jnp.tanh(c)
        # dropout(p=0) between layers == identity; residual adds layer input.
        out = h + xs[r0:r0 + Bp] if residual else h
        y_ref[r0:r0 + Bp, :] = out                             # next layer's input

    # Next layer's initial state is this layer's final state (module semantics).
    hT_ref[...] = h
    cT_ref[...] = c


# -------------------------- Module forward (glue) --------------------------- #
def allennlp_sequential_forward(wih_k, whh_k, b_k, inputs_bsd, hidden_state,
                                *, residual_connection):
    """Replicates AllenNLPSequential.forward with a stack of LSTMs.

    wih_k : (L, D, 4H) bf16   fused per-layer input weights, gate order [i,f,o,g]
    whh_k : (L, H, 4H) bf16   fused per-layer recurrent weights
    b_k   : (L, 1, 4H) f32    per-layer combined bias (b_ih + b_hh)
    inputs_bsd   : (B, S, D) batch-first sequence
    hidden_state : (h0, c0), each (1, B, H)
    returns      : (output (B, S, H), (h_n (1, B, H), c_n (1, B, H)))
    """
    h0, c0 = hidden_state
    B, S, D = inputs_bsd.shape
    L, _, four_h = wih_k.shape
    H = four_h // 4
    assert D == H, "residual path / fused layer stack require input_size == hidden_size"

    # Pad batch up to a sublane multiple so every per-timestep slab and the
    # recurrent state are (8, lanes)-aligned (dense vregs, unmasked stores).
    Bp = max(8, ((B + 7) // 8) * 8)
    x = jnp.transpose(inputs_bsd, (1, 0, 2))                   # (S, B, D) time-major
    x = jnp.pad(x, ((0, 0), (0, Bp - B), (0, 0))).reshape(S * Bp, D)
    h0p = jnp.pad(h0[0], ((0, Bp - B), (0, 0)))
    c0p = jnp.pad(c0[0], ((0, Bp - B), (0, 0)))

    kernel = functools.partial(lstm_stack_kernel, seq_len=S, batch=Bp,
                               residual=residual_connection)
    y, hT, cT = pl.pallas_call(
        kernel,
        out_shape=(
            jax.ShapeDtypeStruct((S * Bp, H), jnp.float32),
            jax.ShapeDtypeStruct((Bp, H), jnp.float32),
            jax.ShapeDtypeStruct((Bp, H), jnp.float32),
        ),
        grid_spec=pltpu.PrefetchScalarGridSpec(
            num_scalar_prefetch=0,
            grid=(L,),                                   # one grid step per layer
            in_specs=[
                pl.BlockSpec((S * Bp, D), lambda l: (0, 0)),               # resident
                pl.BlockSpec((Bp, H), lambda l: (0, 0)),                   # resident
                pl.BlockSpec((Bp, H), lambda l: (0, 0)),                   # resident
                pl.BlockSpec((pl.Squeezed(), D, four_h), lambda l: (l, 0, 0)),
                pl.BlockSpec((pl.Squeezed(), H, four_h), lambda l: (l, 0, 0)),
                pl.BlockSpec((pl.Squeezed(), 1, four_h), lambda l: (l, 0, 0)),
            ],
            out_specs=[
                pl.BlockSpec((S * Bp, H), lambda l: (0, 0)),   # resident carry
                pl.BlockSpec((Bp, H), lambda l: (0, 0)),       # resident carry
                pl.BlockSpec((Bp, H), lambda l: (0, 0)),       # resident carry
            ],
        ),
        compiler_params=pltpu.CompilerParams(
            dimension_semantics=("arbitrary",)),         # layer axis is sequential
    )(x, h0p, c0p, wih_k, whh_k, b_k)

    y = y.reshape(S, Bp, H)[:, :B]                       # drop batch padding
    out = jnp.transpose(y, (1, 0, 2))                    # (B, S, H)
    return out, (hT[:B][None], cT[:B][None])


# ------------------------------ Param packing -------------------------------- #
def pack_lstm_params(w_ih, w_hh, b_ih, b_hh):
    """torch layout (L,4H,D)/(L,4H,H)/(L,4H), gate order [i,f,g,o]  ->
       kernel layout (L,D,4H) bf16 / (L,H,4H) bf16 / (L,1,4H) f32,
       gate order [i,f,o,g] (contiguous sigmoid slab + trailing tanh)."""
    L, four_h, _ = w_ih.shape
    H = four_h // 4
    perm = jnp.concatenate([jnp.arange(0, H), jnp.arange(H, 2 * H),
                            jnp.arange(3 * H, 4 * H), jnp.arange(2 * H, 3 * H)])
    wih_k = jnp.transpose(w_ih[:, perm, :], (0, 2, 1)).astype(jnp.bfloat16)
    whh_k = jnp.transpose(w_hh[:, perm, :], (0, 2, 1)).astype(jnp.bfloat16)
    b_k = (b_ih + b_hh)[:, perm][:, None, :].astype(jnp.float32)
    return wih_k, whh_k, b_k


# ------------------------------ Pure-JAX ref --------------------------------- #
def _ref_forward(wih_k, whh_k, b_k, inputs_bsd, hidden_state,
                 *, residual_connection):
    """Module semantics in plain JAX.  Matmul precision mirrors the kernel
    (bf16 operands, f32 accumulation); state / gates / residual in f32."""
    h0, c0 = hidden_state
    L = wih_k.shape[0]
    H = whh_k.shape[1]
    x, h, c = inputs_bsd, h0[0], c0[0]
    for li in range(L):
        wih, whh, b = wih_k[li], whh_k[li], b_k[li]

        def step(carry, x_t, wih=wih, whh=whh, b=b):
            hh, cc = carry
            g = (jnp.dot(x_t.astype(jnp.bfloat16), wih, preferred_element_type=jnp.float32)
                 + jnp.dot(hh.astype(jnp.bfloat16), whh, preferred_element_type=jnp.float32)
                 + b)
            i = jax.nn.sigmoid(g[:, 0 * H:1 * H])
            f = jax.nn.sigmoid(g[:, 1 * H:2 * H])
            o = jax.nn.sigmoid(g[:, 2 * H:3 * H])
            gg = jnp.tanh(g[:, 3 * H:4 * H])
            cc = f * cc + i * gg
            hh = o * jnp.tanh(cc)
            return (hh, cc), hh

        (h, c), ys = lax.scan(step, (h, c), jnp.transpose(x, (1, 0, 2)))
        y = jnp.transpose(ys, (1, 0, 2))
        if residual_connection:
            y = y + x
        x = y
    return x, (h[None], c[None])


# ---------------------------------- main ------------------------------------- #
if __name__ == "__main__":
    B, S, D, H = 2, 8, 32, 32          # input_size == hidden_size (residual path)
    NUM_LAYERS = 3
    RESIDUAL = True

    key = jax.random.PRNGKey(0)
    bound = 1.0 / jnp.sqrt(H)

    key, k1, k2, k3, k4 = jax.random.split(key, 5)
    # torch-layout LSTM parameters (gate order [i, f, g, o]).
    w_ih = jax.random.uniform(k1, (NUM_LAYERS, 4 * H, D), jnp.float32, -bound, bound)
    w_hh = jax.random.uniform(k2, (NUM_LAYERS, 4 * H, H), jnp.float32, -bound, bound)
    b_ih = jax.random.uniform(k3, (NUM_LAYERS, 4 * H), jnp.float32, -bound, bound)
    b_hh = jax.random.uniform(k4, (NUM_LAYERS, 4 * H), jnp.float32, -bound, bound)
    wih_k, whh_k, b_k = pack_lstm_params(w_ih, w_hh, b_ih, b_hh)

    key, kx, kh, kc = jax.random.split(key, 4)
    inputs = jax.random.normal(kx, (B, S, D), jnp.float32)
    h0 = jax.random.normal(kh, (1, B, H), jnp.float32)
    c0 = jax.random.normal(kc, (1, B, H), jnp.float32)

    out, (h_n, c_n) = allennlp_sequential_forward(
        wih_k, whh_k, b_k, inputs, (h0, c0), residual_connection=RESIDUAL)
    out = jax.block_until_ready(out)
    h_n = jax.block_until_ready(h_n)
    c_n = jax.block_until_ready(c_n)

    ref_out, (ref_h, ref_c) = _ref_forward(
        wih_k, whh_k, b_k, inputs, (h0, c0), residual_connection=RESIDUAL)

    assert out.shape == (B, S, H) and h_n.shape == (1, B, H) and c_n.shape == (1, B, H)
    # Tolerance reflects bf16 matmul operands (identically applied in the ref).
    assert jnp.allclose(out, ref_out, atol=5e-3, rtol=5e-3)
    assert jnp.allclose(h_n, ref_h, atol=5e-3, rtol=5e-3)
    assert jnp.allclose(c_n, ref_c, atol=5e-3, rtol=5e-3)

    print("KERNEL_OK")
</pallas_src>

<mosaic_0001>
module attributes {stable_mosaic.version = 11 : i64} {
  func.func @lstm_stack_kernel(%arg0: i32, %arg1: memref<64x32xf32, #tpu.memory_space<vmem>>, %arg2: memref<8x32xf32, #tpu.memory_space<vmem>>, %arg3: memref<8x32xf32, #tpu.memory_space<vmem>>, %arg4: memref<1x32x128xbf16, #tpu.memory_space<vmem>>, %arg5: memref<1x32x128xbf16, #tpu.memory_space<vmem>>, %arg6: memref<1x1x128xf32, #tpu.memory_space<vmem>>, %arg7: memref<64x32xf32, #tpu.memory_space<vmem>>, %arg8: memref<8x32xf32, #tpu.memory_space<vmem>>, %arg9: memref<8x32xf32, #tpu.memory_space<vmem>>) attributes {dimension_semantics = [#tpu.dimension_semantics<arbitrary>], iteration_bounds = array<i64: 3>, scalar_prefetch = 0 : i64, scratch_operands = 0 : i64, tpu.core_type = #tpu.core_type<tc>, window_params = [{pipeline_mode = #tpu.pipeline_mode<synchronous>, transform_indices = @transform_0, window_bounds = array<i64: 64, 32>}, {pipeline_mode = #tpu.pipeline_mode<synchronous>, transform_indices = @transform_1, window_bounds = array<i64: 8, 32>}, {pipeline_mode = #tpu.pipeline_mode<synchronous>, transform_indices = @transform_2, window_bounds = array<i64: 8, 32>}, {transform_indices = @transform_3, window_bounds = array<i64: 1, 32, 128>}, {transform_indices = @transform_4, window_bounds = array<i64: 1, 32, 128>}, {transform_indices = @transform_5, window_bounds = array<i64: 1, 1, 128>}, {pipeline_mode = #tpu.pipeline_mode<synchronous>, transform_indices = @transform_6, window_bounds = array<i64: 64, 32>}, {pipeline_mode = #tpu.pipeline_mode<synchronous>, transform_indices = @transform_7, window_bounds = array<i64: 8, 32>}, {pipeline_mode = #tpu.pipeline_mode<synchronous>, transform_indices = @transform_8, window_bounds = array<i64: 8, 32>}]} {
    %c0_i32 = arith.constant 0 : i32
    %0 = arith.cmpi eq, %arg0, %c0_i32 : i32
    %1 = arith.extui %0 : i1 to i32
    %c0_i32_0 = arith.constant 0 : i32
    %2 = arith.cmpi ne, %1, %c0_i32_0 : i32
    scf.if %2 {
      %c0_44 = arith.constant 0 : index
      %c0_45 = arith.constant 0 : index
      %202 = vector.load %arg1[%c0_44, %c0_45] : memref<64x32xf32, #tpu.memory_space<vmem>>, vector<64x32xf32>
      %c0_46 = arith.constant 0 : index
      %c0_47 = arith.constant 0 : index
      %203 = vector.load %arg7[%c0_46, %c0_47] : memref<64x32xf32, #tpu.memory_space<vmem>>, vector<64x32xf32>
      tpu.vector_store %arg7[%c0_46, %c0_47], %202 {strides = array<i32>} : memref<64x32xf32, #tpu.memory_space<vmem>>, vector<64x32xf32>,
      %c0_48 = arith.constant 0 : index
      %c0_49 = arith.constant 0 : index
      %204 = vector.load %arg2[%c0_48, %c0_49] : memref<8x32xf32, #tpu.memory_space<vmem>>, vector<8x32xf32>
      %c0_50 = arith.constant 0 : index
      %c0_51 = arith.constant 0 : index
      %205 = vector.load %arg8[%c0_50, %c0_51] : memref<8x32xf32, #tpu.memory_space<vmem>>, vector<8x32xf32>
      tpu.vector_store %arg8[%c0_50, %c0_51], %204 {strides = array<i32>} : memref<8x32xf32, #tpu.memory_space<vmem>>, vector<8x32xf32>,
      %c0_52 = arith.constant 0 : index
      %c0_53 = arith.constant 0 : index
      %206 = vector.load %arg3[%c0_52, %c0_53] : memref<8x32xf32, #tpu.memory_space<vmem>>, vector<8x32xf32>
      %c0_54 = arith.constant 0 : index
      %c0_55 = arith.constant 0 : index
      %207 = vector.load %arg9[%c0_54, %c0_55] : memref<8x32xf32, #tpu.memory_space<vmem>>, vector<8x32xf32>
      tpu.vector_store %arg9[%c0_54, %c0_55], %206 {strides = array<i32>} : memref<8x32xf32, #tpu.memory_space<vmem>>, vector<8x32xf32>,
    } else {
    }
    %c0 = arith.constant 0 : index
    %c0_1 = arith.constant 0 : index
    %3 = vector.load %arg7[%c0, %c0_1] : memref<64x32xf32, #tpu.memory_space<vmem>>, vector<64x32xf32>
    %c0_2 = arith.constant 0 : index
    %c0_3 = arith.constant 0 : index
    %c0_4 = arith.constant 0 : index
    %4 = vector.load %arg4[%c0_2, %c0_3, %c0_4] : memref<1x32x128xbf16, #tpu.memory_space<vmem>>, vector<1x32x128xbf16>
    %5 = vector.shape_cast %4 : vector<1x32x128xbf16> to vector<32x128xbf16>
    %c0_5 = arith.constant 0 : index
    %c0_6 = arith.constant 0 : index
    %c0_7 = arith.constant 0 : index
    %6 = vector.load %arg5[%c0_5, %c0_6, %c0_7] : memref<1x32x128xbf16, #tpu.memory_space<vmem>>, vector<1x32x128xbf16>
    %7 = vector.shape_cast %6 : vector<1x32x128xbf16> to vector<32x128xbf16>
    %8 = arith.truncf %3 : vector<64x32xf32> to vector<64x32xbf16>
    %cst = arith.constant dense<0.000000e+00> : vector<64x128xf32>
    %9 = tpu.matmul %8, %5, %cst {dimension_numbers = #tpu.dot_dimension_numbers<[1], [0], [0], [1], [0, 0, 1, 1], [], []>} : vector<64x32xbf16>, vector<32x128xbf16>, vector<64x128xf32> -> vector<64x128xf32>
    %c0_8 = arith.constant 0 : index
    %c0_9 = arith.constant 0 : index
    %c0_10 = arith.constant 0 : index
    %10 = vector.load %arg6[%c0_8, %c0_9, %c0_10] : memref<1x1x128xf32, #tpu.memory_space<vmem>>, vector<1x1x128xf32>
    %11 = vector.shape_cast %10 : vector<1x1x128xf32> to vector<1x128xf32>
    %12 = vector.broadcast %11 : vector<1x128xf32> to vector<64x128xf32>
    %13 = arith.addf %9, %12 : vector<64x128xf32>
    %c0_11 = arith.constant 0 : index
    %c0_12 = arith.constant 0 : index
    %14 = vector.load %arg8[%c0_11, %c0_12] : memref<8x32xf32, #tpu.memory_space<vmem>>, vector<8x32xf32>
    %c0_13 = arith.constant 0 : index
    %c0_14 = arith.constant 0 : index
    %15 = vector.load %arg9[%c0_13, %c0_14] : memref<8x32xf32, #tpu.memory_space<vmem>>, vector<8x32xf32>
    %16 = vector.extract_strided_slice %13 {offsets = [0, 0], sizes = [8, 128], strides = [1, 1]} : vector<64x128xf32> to vector<8x128xf32>
    %17 = arith.truncf %14 : vector<8x32xf32> to vector<8x32xbf16>
    %cst_15 = arith.constant dense<0.000000e+00> : vector<8x128xf32>
    %18 = tpu.matmul %17, %7, %cst_15 {dimension_numbers = #tpu.dot_dimension_numbers<[1], [0], [0], [1], [0, 0, 1, 1], [], []>} : vector<8x32xbf16>, vector<32x128xbf16>, vector<8x128xf32> -> vector<8x128xf32>
    %19 = arith.addf %16, %18 : vector<8x128xf32>
    %20 = vector.extract_strided_slice %19 {offsets = [0, 0], sizes = [8, 96], strides = [1, 1]} : vector<8x128xf32> to vector<8x96xf32>
    %21 = arith.negf %20 : vector<8x96xf32>
    %22 = math.exp %21 : vector<8x96xf32>
    %cst_16 = arith.constant 1.000000e+00 : f32
    %23 = vector.broadcast %cst_16 : f32 to vector<8x96xf32>
    %24 = arith.addf %23, %22 : vector<8x96xf32>
    %25 = arith.divf %23, %24 : vector<8x96xf32>
    %26 = vector.extract_strided_slice %25 {offsets = [0, 0], sizes = [8, 32], strides = [1, 1]} : vector<8x96xf32> to vector<8x32xf32>
    %27 = vector.extract_strided_slice %25 {offsets = [0, 32], sizes = [8, 32], strides = [1, 1]} : vector<8x96xf32> to vector<8x32xf32>
    %28 = vector.extract_strided_slice %25 {offsets = [0, 64], sizes = [8, 32], strides = [1, 1]} : vector<8x96xf32> to vector<8x32xf32>
    %29 = vector.extract_strided_slice %19 {offsets = [0, 96], sizes = [8, 32], strides = [1, 1]} : vector<8x128xf32> to vector<8x32xf32>
    %30 = math.tanh %29 : vector<8x32xf32>
    %31 = arith.mulf %27, %15 : vector<8x32xf32>
    %32 = arith.mulf %26, %30 : vector<8x32xf32>
    %33 = arith.addf %31, %32 : vector<8x32xf32>
    %34 = math.tanh %33 : vector<8x32xf32>
    %35 = arith.mulf %28, %34 : vector<8x32xf32>
    %36 = vector.extract_strided_slice %3 {offsets = [0, 0], sizes = [8, 32], strides = [1, 1]} : vector<64x32xf32> to vector<8x32xf32>
    %37 = arith.addf %35, %36 : vector<8x32xf32>
    %c0_17 = arith.constant 0 : index
    %c0_18 = arith.constant 0 : index
    %38 = vector.load %arg7[%c0_17, %c0_18] : memref<64x32xf32, #tpu.memory_space<vmem>>, vector<8x32xf32>
    tpu.vector_store %arg7[%c0_17, %c0_18], %37 {strides = array<i32>} : memref<64x32xf32, #tpu.memory_space<vmem>>, vector<8x32xf32>,
    %39 = vector.extract_strided_slice %13 {offsets = [8, 0], sizes = [8, 128], strides = [1, 1]} : vector<64x128xf32> to vector<8x128xf32>
    %40 = arith.truncf %35 : vector<8x32xf32> to vector<8x32xbf16>
    %cst_19 = arith.constant dense<0.000000e+00> : vector<8x128xf32>
    %41 = tpu.matmul %40, %7, %cst_19 {dimension_numbers = #tpu.dot_dimension_numbers<[1], [0], [0], [1], [0, 0, 1, 1], [], []>} : vector<8x32xbf16>, vector<32x128xbf16>, vector<8x128xf32> -> vector<8x128xf32>
    %42 = arith.addf %39, %41 : vector<8x128xf32>
    %43 = vector.extract_strided_slice %42 {offsets = [0, 0], sizes = [8, 96], strides = [1, 1]} : vector<8x128xf32> to vector<8x96xf32>
    %44 = arith.negf %43 : vector<8x96xf32>
    %45 = math.exp %44 : vector<8x96xf32>
    %cst_20 = arith.constant 1.000000e+00 : f32
    %46 = vector.broadcast %cst_20 : f32 to vector<8x96xf32>
    %47 = arith.addf %46, %45 : vector<8x96xf32>
    %48 = arith.divf %46, %47 : vector<8x96xf32>
    %49 = vector.extract_strided_slice %48 {offsets = [0, 0], sizes = [8, 32], strides = [1, 1]} : vector<8x96xf32> to vector<8x32xf32>
    %50 = vector.extract_strided_slice %48 {offsets = [0, 32], sizes = [8, 32], strides = [1, 1]} : vector<8x96xf32> to vector<8x32xf32>
    %51 = vector.extract_strided_slice %48 {offsets = [0, 64], sizes = [8, 32], strides = [1, 1]} : vector<8x96xf32> to vector<8x32xf32>
    %52 = vector.extract_strided_slice %42 {offsets = [0, 96], sizes = [8, 32], strides = [1, 1]} : vector<8x128xf32> to vector<8x32xf32>
    %53 = math.tanh %52 : vector<8x32xf32>
    %54 = arith.mulf %50, %33 : vector<8x32xf32>
    %55 = arith.mulf %49, %53 : vector<8x32xf32>
    %56 = arith.addf %54, %55 : vector<8x32xf32>
    %57 = math.tanh %56 : vector<8x32xf32>
    %58 = arith.mulf %51, %57 : vector<8x32xf32>
    %59 = vector.extract_strided_slice %3 {offsets = [8, 0], sizes = [8, 32], strides = [1, 1]} : vector<64x32xf32> to vector<8x32xf32>
    %60 = arith.addf %58, %59 : vector<8x32xf32>
    %c8 = arith.constant 8 : index
    %c0_21 = arith.constant 0 : index
    %61 = vector.load %arg7[%c8, %c0_21] : memref<64x32xf32, #tpu.memory_space<vmem>>, vector<8x32xf32>
    tpu.vector_store %arg7[%c8, %c0_21], %60 {strides = array<i32>} : memref<64x32xf32, #tpu.memory_space<vmem>>, vector<8x32xf32>,
    %62 = vector.extract_strided_slice %13 {offsets = [16, 0], sizes = [8, 128], strides = [1, 1]} : vector<64x128xf32> to vector<8x128xf32>
    %63 = arith.truncf %58 : vector<8x32xf32> to vector<8x32xbf16>
    %cst_22 = arith.constant dense<0.000000e+00> : vector<8x128xf32>
    %64 = tpu.matmul %63, %7, %cst_22 {dimension_numbers = #tpu.dot_dimension_numbers<[1], [0], [0], [1], [0, 0, 1, 1], [], []>} : vector<8x32xbf16>, vector<32x128xbf16>, vector<8x128xf32> -> vector<8x128xf32>
    %65 = arith.addf %62, %64 : vector<8x128xf32>
    %66 = vector.extract_strided_slice %65 {offsets = [0, 0], sizes = [8, 96], strides = [1, 1]} : vector<8x128xf32> to vector<8x96xf32>
    %67 = arith.negf %66 : vector<8x96xf32>
    %68 = math.exp %67 : vector<8x96xf32>
    %cst_23 = arith.constant 1.000000e+00 : f32
    %69 = vector.broadcast %cst_23 : f32 to vector<8x96xf32>
    %70 = arith.addf %69, %68 : vector<8x96xf32>
    %71 = arith.divf %69, %70 : vector<8x96xf32>
    %72 = vector.extract_strided_slice %71 {offsets = [0, 0], sizes = [8, 32], strides = [1, 1]} : vector<8x96xf32> to vector<8x32xf32>
    %73 = vector.extract_strided_slice %71 {offsets = [0, 32], sizes = [8, 32], strides = [1, 1]} : vector<8x96xf32> to vector<8x32xf32>
    %74 = vector.extract_strided_slice %71 {offsets = [0, 64], sizes = [8, 32], strides = [1, 1]} : vector<8x96xf32> to vector<8x32xf32>
    %75 = vector.extract_strided_slice %65 {offsets = [0, 96], sizes = [8, 32], strides = [1, 1]} : vector<8x128xf32> to vector<8x32xf32>
    %76 = math.tanh %75 : vector<8x32xf32>
    %77 = arith.mulf %73, %56 : vector<8x32xf32>
    %78 = arith.mulf %72, %76 : vector<8x32xf32>
    %79 = arith.addf %77, %78 : vector<8x32xf32>
    %80 = math.tanh %79 : vector<8x32xf32>
    %81 = arith.mulf %74, %80 : vector<8x32xf32>
    %82 = vector.extract_strided_slice %3 {offsets = [16, 0], sizes = [8, 32], strides = [1, 1]} : vector<64x32xf32> to vector<8x32xf32>
    %83 = arith.addf %81, %82 : vector<8x32xf32>
    %c16 = arith.constant 16 : index
    %c0_24 = arith.constant 0 : index
    %84 = vector.load %arg7[%c16, %c0_24] : memref<64x32xf32, #tpu.memory_space<vmem>>, vector<8x32xf32>
    tpu.vector_store %arg7[%c16, %c0_24], %83 {strides = array<i32>} : memref<64x32xf32, #tpu.memory_space<vmem>>, vector<8x32xf32>,
    %85 = vector.extract_strided_slice %13 {offsets = [24, 0], sizes = [8, 128], strides = [1, 1]} : vector<64x128xf32> to vector<8x128xf32>
    %86 = arith.truncf %81 : vector<8x32xf32> to vector<8x32xbf16>
    %cst_25 = arith.constant dense<0.000000e+00> : vector<8x128xf32>
    %87 = tpu.matmul %86, %7, %cst_25 {dimension_numbers = #tpu.dot_dimension_numbers<[1], [0], [0], [1], [0, 0, 1, 1], [], []>} : vector<8x32xbf16>, vector<32x128xbf16>, vector<8x128xf32> -> vector<8x128xf32>
    %88 = arith.addf %85, %87 : vector<8x128xf32>
    %89 = vector.extract_strided_slice %88 {offsets = [0, 0], sizes = [8, 96], strides = [1, 1]} : vector<8x128xf32> to vector<8x96xf32>
    %90 = arith.negf %89 : vector<8x96xf32>
    %91 = math.exp %90 : vector<8x96xf32>
    %cst_26 = arith.constant 1.000000e+00 : f32
    %92 = vector.broadcast %cst_26 : f32 to vector<8x96xf32>
    %93 = arith.addf %92, %91 : vector<8x96xf32>
    %94 = arith.divf %92, %93 : vector<8x96xf32>
    %95 = vector.extract_strided_slice %94 {offsets = [0, 0], sizes = [8, 32], strides = [1, 1]} : vector<8x96xf32> to vector<8x32xf32>
    %96 = vector.extract_strided_slice %94 {offsets = [0, 32], sizes = [8, 32], strides = [1, 1]} : vector<8x96xf32> to vector<8x32xf32>
    %97 = vector.extract_strided_slice %94 {offsets = [0, 64], sizes = [8, 32], strides = [1, 1]} : vector<8x96xf32> to vector<8x32xf32>
    %98 = vector.extract_strided_slice %88 {offsets = [0, 96], sizes = [8, 32], strides = [1, 1]} : vector<8x128xf32> to vector<8x32xf32>
    %99 = math.tanh %98 : vector<8x32xf32>
    %100 = arith.mulf %96, %79 : vector<8x32xf32>
    %101 = arith.mulf %95, %99 : vector<8x32xf32>
    %102 = arith.addf %100, %101 : vector<8x32xf32>
    %103 = math.tanh %102 : vector<8x32xf32>
    %104 = arith.mulf %97, %103 : vector<8x32xf32>
    %105 = vector.extract_strided_slice %3 {offsets = [24, 0], sizes = [8, 32], strides = [1, 1]} : vector<64x32xf32> to vector<8x32xf32>
    %106 = arith.addf %104, %105 : vector<8x32xf32>
    %c24 = arith.constant 24 : index
    %c0_27 = arith.constant 0 : index
    %107 = vector.load %arg7[%c24, %c0_27] : memref<64x32xf32, #tpu.memory_space<vmem>>, vector<8x32xf32>
    tpu.vector_store %arg7[%c24, %c0_27], %106 {strides = array<i32>} : memref<64x32xf32, #tpu.memory_space<vmem>>, vector<8x32xf32>,
    %108 = vector.extract_strided_slice %13 {offsets = [32, 0], sizes = [8, 128], strides = [1, 1]} : vector<64x128xf32> to vector<8x128xf32>
    %109 = arith.truncf %104 : vector<8x32xf32> to vector<8x32xbf16>
    %cst_28 = arith.constant dense<0.000000e+00> : vector<8x128xf32>
    %110 = tpu.matmul %109, %7, %cst_28 {dimension_numbers = #tpu.dot_dimension_numbers<[1], [0], [0], [1], [0, 0, 1, 1], [], []>} : vector<8x32xbf16>, vector<32x128xbf16>, vector<8x128xf32> -> vector<8x128xf32>
    %111 = arith.addf %108, %110 : vector<8x128xf32>
    %112 = vector.extract_strided_slice %111 {offsets = [0, 0], sizes = [8, 96], strides = [1, 1]} : vector<8x128xf32> to vector<8x96xf32>
    %113 = arith.negf %112 : vector<8x96xf32>
    %114 = math.exp %113 : vector<8x96xf32>
    %cst_29 = arith.constant 1.000000e+00 : f32
    %115 = vector.broadcast %cst_29 : f32 to vector<8x96xf32>
    %116 = arith.addf %115, %114 : vector<8x96xf32>
    %117 = arith.divf %115, %116 : vector<8x96xf32>
    %118 = vector.extract_strided_slice %117 {offsets = [0, 0], sizes = [8, 32], strides = [1, 1]} : vector<8x96xf32> to vector<8x32xf32>
    %119 = vector.extract_strided_slice %117 {offsets = [0, 32], sizes = [8, 32], strides = [1, 1]} : vector<8x96xf32> to vector<8x32xf32>
    %120 = vector.extract_strided_slice %117 {offsets = [0, 64], sizes = [8, 32], strides = [1, 1]} : vector<8x96xf32> to vector<8x32xf32>
    %121 = vector.extract_strided_slice %111 {offsets = [0, 96], sizes = [8, 32], strides = [1, 1]} : vector<8x128xf32> to vector<8x32xf32>
    %122 = math.tanh %121 : vector<8x32xf32>
    %123 = arith.mulf %119, %102 : vector<8x32xf32>
    %124 = arith.mulf %118, %122 : vector<8x32xf32>
    %125 = arith.addf %123, %124 : vector<8x32xf32>
    %126 = math.tanh %125 : vector<8x32xf32>
    %127 = arith.mulf %120, %126 : vector<8x32xf32>
    %128 = vector.extract_strided_slice %3 {offsets = [32, 0], sizes = [8, 32], strides = [1, 1]} : vector<64x32xf32> to vector<8x32xf32>
    %129 = arith.addf %127, %128 : vector<8x32xf32>
    %c32 = arith.constant 32 : index
    %c0_30 = arith.constant 0 : index
    %130 = vector.load %arg7[%c32, %c0_30] : memref<64x32xf32, #tpu.memory_space<vmem>>, vector<8x32xf32>
    tpu.vector_store %arg7[%c32, %c0_30], %129 {strides = array<i32>} : memref<64x32xf32, #tpu.memory_space<vmem>>, vector<8x32xf32>,
    %131 = vector.extract_strided_slice %13 {offsets = [40, 0], sizes = [8, 128], strides = [1, 1]} : vector<64x128xf32> to vector<8x128xf32>
    %132 = arith.truncf %127 : vector<8x32xf32> to vector<8x32xbf16>
    %cst_31 = arith.constant dense<0.000000e+00> : vector<8x128xf32>
    %133 = tpu.matmul %132, %7, %cst_31 {dimension_numbers = #tpu.dot_dimension_numbers<[1], [0], [0], [1], [0, 0, 1, 1], [], []>} : vector<8x32xbf16>, vector<32x128xbf16>, vector<8x128xf32> -> vector<8x128xf32>
    %134 = arith.addf %131, %133 : vector<8x128xf32>
    %135 = vector.extract_strided_slice %134 {offsets = [0, 0], sizes = [8, 96], strides = [1, 1]} : vector<8x128xf32> to vector<8x96xf32>
    %136 = arith.negf %135 : vector<8x96xf32>
    %137 = math.exp %136 : vector<8x96xf32>
    %cst_32 = arith.constant 1.000000e+00 : f32
    %138 = vector.broadcast %cst_32 : f32 to vector<8x96xf32>
    %139 = arith.addf %138, %137 : vector<8x96xf32>
    %140 = arith.divf %138, %139 : vector<8x96xf32>
    %141 = vector.extract_strided_slice %140 {offsets = [0, 0], sizes = [8, 32], strides = [1, 1]} : vector<8x96xf32> to vector<8x32xf32>
    %142 = vector.extract_strided_slice %140 {offsets = [0, 32], sizes = [8, 32], strides = [1, 1]} : vector<8x96xf32> to vector<8x32xf32>
    %143 = vector.extract_strided_slice %140 {offsets = [0, 64], sizes = [8, 32], strides = [1, 1]} : vector<8x96xf32> to vector<8x32xf32>
    %144 = vector.extract_strided_slice %134 {offsets = [0, 96], sizes = [8, 32], strides = [1, 1]} : vector<8x128xf32> to vector<8x32xf32>
    %145 = math.tanh %144 : vector<8x32xf32>
    %146 = arith.mulf %142, %125 : vector<8x32xf32>
    %147 = arith.mulf %141, %145 : vector<8x32xf32>
    %148 = arith.addf %146, %147 : vector<8x32xf32>
    %149 = math.tanh %148 : vector<8x32xf32>
    %150 = arith.mulf %143, %149 : vector<8x32xf32>
    %151 = vector.extract_strided_slice %3 {offsets = [40, 0], sizes = [8, 32], strides = [1, 1]} : vector<64x32xf32> to vector<8x32xf32>
    %152 = arith.addf %150, %151 : vector<8x32xf32>
    %c40 = arith.constant 40 : index
    %c0_33 = arith.constant 0 : index
    %153 = vector.load %arg7[%c40, %c0_33] : memref<64x32xf32, #tpu.memory_space<vmem>>, vector<8x32xf32>
    tpu.vector_store %arg7[%c40, %c0_33], %152 {strides = array<i32>} : memref<64x32xf32, #tpu.memory_space<vmem>>, vector<8x32xf32>,
    %154 = vector.extract_strided_slice %13 {offsets = [48, 0], sizes = [8, 128], strides = [1, 1]} : vector<64x128xf32> to vector<8x128xf32>
    %155 = arith.truncf %150 : vector<8x32xf32> to vector<8x32xbf16>
    %cst_34 = arith.constant dense<0.000000e+00> : vector<8x128xf32>
    %156 = tpu.matmul %155, %7, %cst_34 {dimension_numbers = #tpu.dot_dimension_numbers<[1], [0], [0], [1], [0, 0, 1, 1], [], []>} : vector<8x32xbf16>, vector<32x128xbf16>, vector<8x128xf32> -> vector<8x128xf32>
    %157 = arith.addf %154, %156 : vector<8x128xf32>
    %158 = vector.extract_strided_slice %157 {offsets = [0, 0], sizes = [8, 96], strides = [1, 1]} : vector<8x128xf32> to vector<8x96xf32>
    %159 = arith.negf %158 : vector<8x96xf32>
    %160 = math.exp %159 : vector<8x96xf32>
    %cst_35 = arith.constant 1.000000e+00 : f32
    %161 = vector.broadcast %cst_35 : f32 to vector<8x96xf32>
    %162 = arith.addf %161, %160 : vector<8x96xf32>
    %163 = arith.divf %161, %162 : vector<8x96xf32>
    %164 = vector.extract_strided_slice %163 {offsets = [0, 0], sizes = [8, 32], strides = [1, 1]} : vector<8x96xf32> to vector<8x32xf32>
    %165 = vector.extract_strided_slice %163 {offsets = [0, 32], sizes = [8, 32], strides = [1, 1]} : vector<8x96xf32> to vector<8x32xf32>
    %166 = vector.extract_strided_slice %163 {offsets = [0, 64], sizes = [8, 32], strides = [1, 1]} : vector<8x96xf32> to vector<8x32xf32>
    %167 = vector.extract_strided_slice %157 {offsets = [0, 96], sizes = [8, 32], strides = [1, 1]} : vector<8x128xf32> to vector<8x32xf32>
    %168 = math.tanh %167 : vector<8x32xf32>
    %169 = arith.mulf %165, %148 : vector<8x32xf32>
    %170 = arith.mulf %164, %168 : vector<8x32xf32>
    %171 = arith.addf %169, %170 : vector<8x32xf32>
    %172 = math.tanh %171 : vector<8x32xf32>
    %173 = arith.mulf %166, %172 : vector<8x32xf32>
    %174 = vector.extract_strided_slice %3 {offsets = [48, 0], sizes = [8, 32], strides = [1, 1]} : vector<64x32xf32> to vector<8x32xf32>
    %175 = arith.addf %173, %174 : vector<8x32xf32>
    %c48 = arith.constant 48 : index
    %c0_36 = arith.constant 0 : index
    %176 = vector.load %arg7[%c48, %c0_36] : memref<64x32xf32, #tpu.memory_space<vmem>>, vector<8x32xf32>
    tpu.vector_store %arg7[%c48, %c0_36], %175 {strides = array<i32>} : memref<64x32xf32, #tpu.memory_space<vmem>>, vector<8x32xf32>,
    %177 = vector.extract_strided_slice %13 {offsets = [56, 0], sizes = [8, 128], strides = [1, 1]} : vector<64x128xf32> to vector<8x128xf32>
    %178 = arith.truncf %173 : vector<8x32xf32> to vector<8x32xbf16>
    %cst_37 = arith.constant dense<0.000000e+00> : vector<8x128xf32>
    %179 = tpu.matmul %178, %7, %cst_37 {dimension_numbers = #tpu.dot_dimension_numbers<[1], [0], [0], [1], [0, 0, 1, 1], [], []>} : vector<8x32xbf16>, vector<32x128xbf16>, vector<8x128xf32> -> vector<8x128xf32>
    %180 = arith.addf %177, %179 : vector<8x128xf32>
    %181 = vector.extract_strided_slice %180 {offsets = [0, 0], sizes = [8, 96], strides = [1, 1]} : vector<8x128xf32> to vector<8x96xf32>
    %182 = arith.negf %181 : vector<8x96xf32>
    %183 = math.exp %182 : vector<8x96xf32>
    %cst_38 = arith.constant 1.000000e+00 : f32
    %184 = vector.broadcast %cst_38 : f32 to vector<8x96xf32>
    %185 = arith.addf %184, %183 : vector<8x96xf32>
    %186 = arith.divf %184, %185 : vector<8x96xf32>
    %187 = vector.extract_strided_slice %186 {offsets = [0, 0], sizes = [8, 32], strides = [1, 1]} : vector<8x96xf32> to vector<8x32xf32>
    %188 = vector.extract_strided_slice %186 {offsets = [0, 32], sizes = [8, 32], strides = [1, 1]} : vector<8x96xf32> to vector<8x32xf32>
    %189 = vector.extract_strided_slice %186 {offsets = [0, 64], sizes = [8, 32], strides = [1, 1]} : vector<8x96xf32> to vector<8x32xf32>
    %190 = vector.extract_strided_slice %180 {offsets = [0, 96], sizes = [8, 32], strides = [1, 1]} : vector<8x128xf32> to vector<8x32xf32>
    %191 = math.tanh %190 : vector<8x32xf32>
    %192 = arith.mulf %188, %171 : vector<8x32xf32>
    %193 = arith.mulf %187, %191 : vector<8x32xf32>
    %194 = arith.addf %192, %193 : vector<8x32xf32>
    %195 = math.tanh %194 : vector<8x32xf32>
    %196 = arith.mulf %189, %195 : vector<8x32xf32>
    %197 = vector.extract_strided_slice %3 {offsets = [56, 0], sizes = [8, 32], strides = [1, 1]} : vector<64x32xf32> to vector<8x32xf32>
    %198 = arith.addf %196, %197 : vector<8x32xf32>
    %c56 = arith.constant 56 : index
    %c0_39 = arith.constant 0 : index
    %199 = vector.load %arg7[%c56, %c0_39] : memref<64x32xf32, #tpu.memory_space<vmem>>, vector<8x32xf32>
    tpu.vector_store %arg7[%c56, %c0_39], %198 {strides = array<i32>} : memref<64x32xf32, #tpu.memory_space<vmem>>, vector<8x32xf32>,
    %c0_40 = arith.constant 0 : index
    %c0_41 = arith.constant 0 : index
    %200 = vector.load %arg8[%c0_40, %c0_41] : memref<8x32xf32, #tpu.memory_space<vmem>>, vector<8x32xf32>
    tpu.vector_store %arg8[%c0_40, %c0_41], %196 {strides = array<i32>} : memref<8x32xf32, #tpu.memory_space<vmem>>, vector<8x32xf32>,
    %c0_42 = arith.constant 0 : index
    %c0_43 = arith.constant 0 : index
    %201 = vector.load %arg9[%c0_42, %c0_43] : memref<8x32xf32, #tpu.memory_space<vmem>>, vector<8x32xf32>
    tpu.vector_store %arg9[%c0_42, %c0_43], %194 {strides = array<i32>} : memref<8x32xf32, #tpu.memory_space<vmem>>, vector<8x32xf32>,
    return
  }
  func.func @transform_0(%arg0: i32) -> (i32, i32) {
    %c0_i32 = arith.constant 0 : i32
    %c0_i32_0 = arith.constant 0 : i32
    %c0_i32_1 = arith.constant 0 : i32
    return %c0_i32, %c0_i32_0 : i32, i32
  }
  func.func @transform_1(%arg0: i32) -> (i32, i32) {
    %c0_i32 = arith.constant 0 : i32
    %c0_i32_0 = arith.constant 0 : i32
    %c0_i32_1 = arith.constant 0 : i32
    return %c0_i32, %c0_i32_0 : i32, i32
  }
  func.func @transform_2(%arg0: i32) -> (i32, i32) {
    %c0_i32 = arith.constant 0 : i32
    %c0_i32_0 = arith.constant 0 : i32
    %c0_i32_1 = arith.constant 0 : i32
    return %c0_i32, %c0_i32_0 : i32, i32
  }
  func.func @transform_3(%arg0: i32) -> (i32, i32, i32) {
    %c0_i32 = arith.constant 0 : i32
    %c0_i32_0 = arith.constant 0 : i32
    %c0_i32_1 = arith.constant 0 : i32
    return %arg0, %c0_i32, %c0_i32_0 : i32, i32, i32
  }
  func.func @transform_4(%arg0: i32) -> (i32, i32, i32) {
    %c0_i32 = arith.constant 0 : i32
    %c0_i32_0 = arith.constant 0 : i32
    %c0_i32_1 = arith.constant 0 : i32
    return %arg0, %c0_i32, %c0_i32_0 : i32, i32, i32
  }
  func.func @transform_5(%arg0: i32) -> (i32, i32, i32) {
    %c0_i32 = arith.constant 0 : i32
    %c0_i32_0 = arith.constant 0 : i32
    %c0_i32_1 = arith.constant 0 : i32
    return %arg0, %c0_i32, %c0_i32_0 : i32, i32, i32
  }
  func.func @transform_6(%arg0: i32) -> (i32, i32) {
    %c0_i32 = arith.constant 0 : i32
    %c0_i32_0 = arith.constant 0 : i32
    %c0_i32_1 = arith.constant 0 : i32
    return %c0_i32, %c0_i32_0 : i32, i32
  }
  func.func @transform_7(%arg0: i32) -> (i32, i32) {
    %c0_i32 = arith.constant 0 : i32
    %c0_i32_0 = arith.constant 0 : i32
    %c0_i32_1 = arith.constant 0 : i32
    return %c0_i32, %c0_i32_0 : i32, i32
  }
  func.func @transform_8(%arg0: i32) -> (i32, i32) {
    %c0_i32 = arith.constant 0 : i32
    %c0_i32_0 = arith.constant 0 : i32
    %c0_i32_1 = arith.constant 0 : i32
    return %c0_i32, %c0_i32_0 : i32, i32
  }
}

</mosaic_0001>

<llo_original>
// kernel: tpu_custom_call.1
$region0: #{tpu_custom_call.1}
  #allocation0 [shape = 'u32[]', space=smem, size = 0x4, offset = 0x4, fixed_abs, tag = 'smem constant byte address 0x4 - core index']
  #allocation1 [shape = 'u32[72,128]{1,0:T(1,128)}', space=vmem, size = 0x9000, scoped, tag = 'internal scratch']
  %s0 = inlined_call_operand.vmem [shape: f32[64,32], index: 0, kind: input, shape index: {}]
  %s1 = inlined_call_operand.hbm [shape: f32[8,32], index: 1, kind: input, shape index: {}]
  %s2 = inlined_call_operand.hbm [shape: f32[8,32], index: 2, kind: input, shape index: {}]
  %s3 = inlined_call_operand.vmem [shape: bf16[3,32,128], index: 3, kind: input, shape index: {}]
  %s4 = inlined_call_operand.vmem [shape: bf16[3,32,128], index: 4, kind: input, shape index: {}]
  %s5 = inlined_call_operand.vmem [shape: f32[3,1,128], index: 5, kind: input, shape index: {}]
  %s6 = inlined_call_operand.vmem [shape: f32[64,32], index: 6, kind: output, shape index: {0}]
  %s7 = inlined_call_operand.hbm [shape: f32[8,32], index: 7, kind: output, shape index: {1}]
  %s8 = inlined_call_operand.hbm [shape: f32[8,32], index: 8, kind: output, shape index: {2}]
  %9 = xla_tuple %s6, %s7, %s8
  %s10 = sld [smem:[#allocation0]]
  $region85: #{tpu_custom_call.1} parent=0
    _
  %s12 = ssub.s32 1, %s10
  %s13 = scalar_select 0, %s12, %s10
  $region1: #{tpu_custom_call.1} parent=0
    #allocation2 [shape = 'u8[4096]{0}', space=vmem, size = 0x1000, scoped, tag = 'input window, operand 1, single buffered']
    #allocation3 [shape = 's32[2]{0}', space=sflag, size = 0x8, scoped, tag = 'scoped memory for tpu_custom_call.1']
    #allocation4 [shape = 's32[2]{0}', space=sflag, size = 0x8, scoped, tag = 'scoped memory for tpu_custom_call.1']
    #allocation5 [shape = 'u8[4096]{0}', space=vmem, size = 0x1000, scoped, tag = 'input window, operand 2, single buffered']
    #allocation6 [shape = 's32[1]{0}', space=sflag, size = 0x4, scoped, tag = 'scoped memory for tpu_custom_call.1']
    #allocation7 [shape = 'u8[4096]{0}', space=vmem, size = 0x1000, scoped, tag = 'output window, operand 1, single buffered']
    #allocation8 [shape = 'u8[4096]{0}', space=vmem, size = 0x1000, scoped, tag = 'output window, operand 2, single buffered']
    #allocation9 [shape = 's32[1]{0}', space=sflag, size = 0x4, scoped, tag = 'scoped memory for tpu_custom_call.1']
    %14 = vsyncpa [#allocation3], 0
    %15 = vsyncpa [#allocation6], 0
    %16 = vsyncpa [#allocation4], 0
    %17 = vsyncpa [#allocation9], 0
    loop: start=0, step=1, limit=5
    $region2: #{tpu_custom_call.1} parent=1 // loop_pre_header
      _
    $region3: #{tpu_custom_call.1} parent=1 // loop_header
      %s19 = sphi 0, %s23
      %p20 = scmp.ge.s32.totalorder %s19, 5
      %s27 = sphi 0, %s27
      %s29 = sphi 0, %s27
      %s30 = sphi 0, %s29
      %s44 = sphi 0, %s30
      %s48 = sphi 0, %s48
      %s50 = sphi 0, %s48
      %s51 = sphi 0, %s50
      %s65 = sphi 0, %s51
      %s69 = sphi 0, %s69
      %s71 = sphi 0, %s69
      %s72 = sphi 0, %s71
      %s86 = sphi 0, %s72
      %s92 = sphi 0, %s94
      %s95 = sphi 0, %s92
      %s96 = sphi 0, %s95
      %s112 = sphi 0, %s96
      %s118 = sphi 0, %s120
      %s121 = sphi 0, %s118
      %s122 = sphi 0, %s121
      %s138 = sphi 0, %s122
      %s144 = sphi 0, %s146
      %s147 = sphi 0, %s144
      %s148 = sphi 0, %s147
      %s164 = sphi 0, %s148
      %s168 = sphi 0, %s168
      %s170 = sphi 0, %s168
      %s171 = sphi 0, %s170
      %s185 = sphi 0, %s171
      %s189 = sphi 0, %s189
      %s191 = sphi 0, %s189
      %s192 = sphi 0, %s191
      %s206 = sphi 0, %s192
      %s210 = sphi 0, %s210
      %s212 = sphi 0, %s210
      %s213 = sphi 0, %s212
      %s227 = sphi 0, %s213
    $region4: #{tpu_custom_call.1} parent=1 // loop_header_branch
      %22 = sbr.rel (%p20) target = $region8
    $region5: #{tpu_custom_call.1} parent=1 // loop_body
      %s24 = ssub.s32 %s19, 1
      %s25 = ssub.s32 %s19, 2
      %s26 = sadd.s32 %s19, 1
      %s28 = sadd.s32 %s27, 1
      %p31 = scmp.eq.s32.totalorder %s19, 2
      %p32 = scmp.ne.s32.totalorder %s27, %s29
      %p33 = scmp.eq.s32.totalorder %s19, 0
      %p34 = por %p32, %p33
      %p35 = scmp.ne.s32.totalorder %s27, %s29
      %p36 = scmp.eq.s32.totalorder %s24, 2
      %p37 = por %p35, %p36
      %p38 = scmp.ne.s32.totalorder %s29, %s30
      %p39 = scmp.eq.s32.totalorder %s24, 0
      %p40 = por %p38, %p39
      %p41 = scmp.ne.s32.totalorder %s29, %s30
      %p42 = scmp.eq.s32.totalorder %s25, 2
      %p43 = por %p41, %p42
      %p45 = scmp.ne.s32.totalorder %s30, %s44
      %p46 = scmp.eq.s32.totalorder %s25, 0
      %p47 = por %p45, %p46
      %s49 = sadd.s32 %s48, 1
      %p52 = scmp.eq.s32.totalorder %s19, 2
      %p53 = scmp.ne.s32.totalorder %s48, %s50
      %p54 = scmp.eq.s32.totalorder %s19, 0
      %p55 = por %p53, %p54
      %p56 = scmp.ne.s32.totalorder %s48, %s50
      %p57 = scmp.eq.s32.totalorder %s24, 2
      %p58 = por %p56, %p57
      %p59 = scmp.ne.s32.totalorder %s50, %s51
      %p60 = scmp.eq.s32.totalorder %s24, 0
      %p61 = por %p59, %p60
      %p62 = scmp.ne.s32.totalorder %s50, %s51
      %p63 = scmp.eq.s32.totalorder %s25, 2
      %p64 = por %p62, %p63
      %p66 = scmp.ne.s32.totalorder %s51, %s65
      %p67 = scmp.eq.s32.totalorder %s25, 0
      %p68 = por %p66, %p67
      %s70 = sadd.s32 %s69, 1
      %p73 = scmp.eq.s32.totalorder %s19, 2
      %p74 = scmp.ne.s32.totalorder %s69, %s71
      %p75 = scmp.eq.s32.totalorder %s19, 0
      %p76 = por %p74, %p75
      %p77 = scmp.ne.s32.totalorder %s69, %s71
      %p78 = scmp.eq.s32.totalorder %s24, 2
      %p79 = por %p77, %p78
      %p80 = scmp.ne.s32.totalorder %s71, %s72
      %p81 = scmp.eq.s32.totalorder %s24, 0
      %p82 = por %p80, %p81
      %p83 = scmp.ne.s32.totalorder %s71, %s72
      %p84 = scmp.eq.s32.totalorder %s25, 2
      %p85 = por %p83, %p84
      %p87 = scmp.ne.s32.totalorder %s72, %s86
      %p88 = scmp.eq.s32.totalorder %s25, 0
      %p89 = por %p87, %p88
      %s90 = ssub.s32 %s19, %s26
      %p91 = scmp.eq.s32.totalorder %s90, 0
      %s93 = sadd.s32 %s92, 1
      %s94 = scalar_select %p91, %s92, %s93
      %p97 = pneg %p91
      %p98 = scmp.eq.s32.totalorder %s19, 2
      %p99 = por %p97, %p98
      %p100 = scmp.ne.s32.totalorder %s92, %s95
      %p101 = scmp.eq.s32.totalorder %s19, 0
      %p102 = por %p100, %p101
      %p103 = scmp.ne.s32.totalorder %s92, %s95
      %p104 = scmp.eq.s32.totalorder %s24, 2
      %p105 = por %p103, %p104
      %p106 = scmp.ne.s32.totalorder %s95, %s96
      %p107 = scmp.eq.s32.totalorder %s24, 0
      %p108 = por %p106, %p107
      %p109 = scmp.ne.s32.totalorder %s95, %s96
      %p110 = scmp.eq.s32.totalorder %s25, 2
      %p111 = por %p109, %p110
      %p113 = scmp.ne.s32.totalorder %s96, %s112
      %p114 = scmp.eq.s32.totalorder %s25, 0
      %p115 = por %p113, %p114
      %s116 = ssub.s32 %s19, %s26
      %p117 = scmp.eq.s32.totalorder %s116, 0
      %s119 = sadd.s32 %s118, 1
      %s120 = scalar_select %p117, %s118, %s119
      %p123 = pneg %p117
      %p124 = scmp.eq.s32.totalorder %s19, 2
      %p125 = por %p123, %p124
      %p126 = scmp.ne.s32.totalorder %s118, %s121
      %p127 = scmp.eq.s32.totalorder %s19, 0
      %p128 = por %p126, %p127
      %p129 = scmp.ne.s32.totalorder %s118, %s121
      %p130 = scmp.eq.s32.totalorder %s24, 2
      %p131 = por %p129, %p130
      %p132 = scmp.ne.s32.totalorder %s121, %s122
      %p133 = scmp.eq.s32.totalorder %s24, 0
      %p134 = por %p132, %p133
      %p135 = scmp.ne.s32.totalorder %s121, %s122
      %p136 = scmp.eq.s32.totalorder %s25, 2
      %p137 = por %p135, %p136
      %p139 = scmp.ne.s32.totalorder %s122, %s138
      %p140 = scmp.eq.s32.totalorder %s25, 0
      %p141 = por %p139, %p140
      %s142 = ssub.s32 %s19, %s26
      %p143 = scmp.eq.s32.totalorder %s142, 0
      %s145 = sadd.s32 %s144, 1
      %s146 = scalar_select %p143, %s144, %s145
      %p149 = pneg %p143
      %p150 = scmp.eq.s32.totalorder %s19, 2
      %p151 = por %p149, %p150
      %p152 = scmp.ne.s32.totalorder %s144, %s147
      %p153 = scmp.eq.s32.totalorder %s19, 0
      %p154 = por %p152, %p153
      %p155 = scmp.ne.s32.totalorder %s144, %s147
      %p156 = scmp.eq.s32.totalorder %s24, 2
      %p157 = por %p155, %p156
      %p158 = scmp.ne.s32.totalorder %s147, %s148
      %p159 = scmp.eq.s32.totalorder %s24, 0
      %p160 = por %p158, %p159
      %p161 = scmp.ne.s32.totalorder %s147, %s148
      %p162 = scmp.eq.s32.totalorder %s25, 2
      %p163 = por %p161, %p162
      %p165 = scmp.ne.s32.totalorder %s148, %s164
      %p166 = scmp.eq.s32.totalorder %s25, 0
      %p167 = por %p165, %p166
      %s169 = sadd.s32 %s168, 1
      %p172 = scmp.eq.s32.totalorder %s19, 2
      %p173 = scmp.ne.s32.totalorder %s168, %s170
      %p174 = scmp.eq.s32.totalorder %s19, 0
      %p175 = por %p173, %p174
      %p176 = scmp.ne.s32.totalorder %s168, %s170
      %p177 = scmp.eq.s32.totalorder %s24, 2
      %p178 = por %p176, %p177
      %p179 = scmp.ne.s32.totalorder %s170, %s171
      %p180 = scmp.eq.s32.totalorder %s24, 0
      %p181 = por %p179, %p180
      %p182 = scmp.ne.s32.totalorder %s170, %s171
      %p183 = scmp.eq.s32.totalorder %s25, 2
      %p184 = por %p182, %p183
      %p186 = scmp.ne.s32.totalorder %s171, %s185
      %p187 = scmp.eq.s32.totalorder %s25, 0
      %p188 = por %p186, %p187
      %s190 = sadd.s32 %s189, 1
      %p193 = scmp.eq.s32.totalorder %s19, 2
      %p194 = scmp.ne.s32.totalorder %s189, %s191
      %p195 = scmp.eq.s32.totalorder %s19, 0
      %p196 = por %p194, %p195
      %p197 = scmp.ne.s32.totalorder %s189, %s191
      %p198 = scmp.eq.s32.totalorder %s24, 2
      %p199 = por %p197, %p198
      %p200 = scmp.ne.s32.totalorder %s191, %s192
      %p201 = scmp.eq.s32.totalorder %s24, 0
      %p202 = por %p200, %p201
      %p203 = scmp.ne.s32.totalorder %s191, %s192
      %p204 = scmp.eq.s32.totalorder %s25, 2
      %p205 = por %p203, %p204
      %p207 = scmp.ne.s32.totalorder %s192, %s206
      %p208 = scmp.eq.s32.totalorder %s25, 0
      %p209 = por %p207, %p208
      %s211 = sadd.s32 %s210, 1
      %p214 = scmp.eq.s32.totalorder %s19, 2
      %p215 = scmp.ne.s32.totalorder %s210, %s212
      %p216 = scmp.eq.s32.totalorder %s19, 0
      %p217 = por %p215, %p216
      %p218 = scmp.ne.s32.totalorder %s210, %s212
      %p219 = scmp.eq.s32.totalorder %s24, 2
      %p220 = por %p218, %p219
      %p221 = scmp.ne.s32.totalorder %s212, %s213
      %p222 = scmp.eq.s32.totalorder %s24, 0
      %p223 = por %p221, %p222
      %p224 = scmp.ne.s32.totalorder %s212, %s213
      %p225 = scmp.eq.s32.totalorder %s25, 2
      %p226 = por %p224, %p225
      %p228 = scmp.ne.s32.totalorder %s213, %s227
      %p229 = scmp.eq.s32.totalorder %s25, 0
      %p230 = por %p228, %p229
      %p231 = scmp.le.s32.totalorder 1, %s19
      %p232 = scmp.lt.s32.totalorder %s19, 4
      %p233 = pnand %p231, %p232
      %p234 = pneg %p233
      // Predicated region
      $region9: #{tpu_custom_call.1} parent=5 // pred_check
        _
      $region10: #{tpu_custom_call.1} parent=5 // pred_check_branch
        %236 = sbr.rel (%p233) target = $region12
      $region11: #{tpu_custom_call.1} parent=5 // pred_region
        %s237 = ssub.s32 %s19, 1
        // Predicated region
        $region13: #{tpu_custom_call.1} parent=11 // pred_check
          %p238 = pneg %p40
        $region14: #{tpu_custom_call.1} parent=11 // pred_check_branch
          %240 = sbr.rel (%p238) target = $region16
        $region15: #{tpu_custom_call.1} parent=11 // pred_region
          _
        $region16: #{tpu_custom_call.1} parent=11 // pred_fallthru
          _
        // Predicated region
        $region17: #{tpu_custom_call.1} parent=11 // pred_check
          %p241 = pneg %p61
        $region18: #{tpu_custom_call.1} parent=11 // pred_check_branch
          %243 = sbr.rel (%p241) target = $region20
        $region19: #{tpu_custom_call.1} parent=11 // pred_region
          %245 = vsyncadd [#allocation3], 0
          %s247 = sshll.u32 %s1, 4
          %s248 = int_to_ptr.hbm [resolvable:$true] %s247
          %s249 = sshll.u32 [#allocation2], 4
          %s250 = int_to_ptr.vmem [resolvable:$true] %s249
          %252 = dma.hbm_to_vmem [thread:$0]  %s248, 128, %s250, [#allocation3]
        $region20: #{tpu_custom_call.1} parent=11 // pred_fallthru
          _
        // Predicated region
        $region21: #{tpu_custom_call.1} parent=11 // pred_check
          %p253 = pneg %p82
        $region22: #{tpu_custom_call.1} parent=11 // pred_check_branch
          %255 = sbr.rel (%p253) target = $region24
        $region23: #{tpu_custom_call.1} parent=11 // pred_region
          %257 = vsyncadd [#allocation6], 0
          %s259 = sshll.u32 %s2, 4
          %s260 = int_to_ptr.hbm [resolvable:$true] %s259
          %s261 = sshll.u32 [#allocation5], 4
          %s262 = int_to_ptr.vmem [resolvable:$true] %s261
          %264 = dma.hbm_to_vmem [thread:$0]  %s260, 128, %s262, [#allocation6]
        $region24: #{tpu_custom_call.1} parent=11 // pred_fallthru
          _
      $region12: #{tpu_custom_call.1} parent=5 // pred_fallthru
        _
      %p265 = scmp.lt.s32.totalorder %s19, 3
      // Predicated region
      $region25: #{tpu_custom_call.1} parent=5 // pred_check
        %p266 = pneg %p265
      $region26: #{tpu_custom_call.1} parent=5 // pred_check_branch
        %268 = sbr.rel (%p266) target = $region28
      $region27: #{tpu_custom_call.1} parent=5 // pred_region
        // Predicated region
        $region29: #{tpu_custom_call.1} parent=27 // pred_check
          %p269 = pneg %p102
        $region30: #{tpu_custom_call.1} parent=27 // pred_check_branch
          %271 = sbr.rel (%p269) target = $region32
        $region31: #{tpu_custom_call.1} parent=27 // pred_region
          %p272 = scmp.lt.s32.totalorder %s19, 2
          %s273 = scalar_select %p272, %s19, 2
          %s274 = smul.addr %s273, 4
          %s275 = smul.addr %s274, 4
          %s276 = scalar_lea.vmem %s3, %s275
        $region32: #{tpu_custom_call.1} parent=27 // pred_fallthru
          _
        // Predicated region
        $region33: #{tpu_custom_call.1} parent=27 // pred_check
          %p277 = pneg %p128
        $region34: #{tpu_custom_call.1} parent=27 // pred_check_branch
          %279 = sbr.rel (%p277) target = $region36
        $region35: #{tpu_custom_call.1} parent=27 // pred_region
          %p280 = scmp.lt.s32.totalorder %s19, 2
          %s281 = scalar_select %p280, %s19, 2
          %s282 = smul.addr %s281, 4
          %s283 = smul.addr %s282, 4
          %s284 = scalar_lea.vmem %s4, %s283
        $region36: #{tpu_custom_call.1} parent=27 // pred_fallthru
          _
        // Predicated region
        $region37: #{tpu_custom_call.1} parent=27 // pred_check
          %p285 = pneg %p154
        $region38: #{tpu_custom_call.1} parent=27 // pred_check_branch
          %287 = sbr.rel (%p285) target = $region40
        $region39: #{tpu_custom_call.1} parent=27 // pred_region
          %p288 = scmp.lt.s32.totalorder %s19, 2
          %s289 = scalar_select %p288, %s19, 2
          %s290 = scalar_lea.vmem %s5, %s289
        $region40: #{tpu_custom_call.1} parent=27 // pred_fallthru
          _
      $region28: #{tpu_custom_call.1} parent=5 // pred_fallthru
        _
      %p291 = scmp.le.s32.totalorder 1, %s19
      %p292 = scmp.lt.s32.totalorder %s19, 4
      %p293 = pnand %p291, %p292
      %p294 = pneg %p293
      // Predicated region
      $region41: #{tpu_custom_call.1} parent=5 // pred_check
        _
      $region42: #{tpu_custom_call.1} parent=5 // pred_check_branch
        %296 = sbr.rel (%p293) target = $region44
      $region43: #{tpu_custom_call.1} parent=5 // pred_region
        %s297 = ssub.s32 %s19, 1
        // Predicated region
        $region45: #{tpu_custom_call.1} parent=43 // pred_check
          %p298 = pneg %p61
        $region46: #{tpu_custom_call.1} parent=43 // pred_check_branch
          %300 = sbr.rel (%p298) target = $region48
        $region47: #{tpu_custom_call.1} parent=43 // pred_region
          %302 = dma.done [#allocation3], 128
        $region48: #{tpu_custom_call.1} parent=43 // pred_fallthru
          _
        // Predicated region
        $region49: #{tpu_custom_call.1} parent=43 // pred_check
          %p303 = pneg %p82
        $region50: #{tpu_custom_call.1} parent=43 // pred_check_branch
          %305 = sbr.rel (%p303) target = $region52
        $region51: #{tpu_custom_call.1} parent=43 // pred_region
          %307 = dma.done [#allocation6], 128
        $region52: #{tpu_custom_call.1} parent=43 // pred_fallthru
          _
        %p308 = pneg %p40
        %p309 = pneg %p37
        %p310 = pneg %p61
        %p311 = pneg %p58
        %p312 = pneg %p82
        %p313 = pneg %p79
        %p314 = scmp.lt.s32.totalorder %s24, 2
        %s315 = scalar_select %p314, %s24, 2
        %s316 = smul.addr %s315, 4
        %s317 = smul.addr %s316, 4
        %s318 = scalar_lea.vmem %s3, %s317
        %p319 = pneg %p108
        %p320 = pneg %p105
        %p321 = scmp.lt.s32.totalorder %s24, 2
        %s322 = scalar_select %p321, %s24, 2
        %s323 = smul.addr %s322, 4
        %s324 = smul.addr %s323, 4
        %s325 = scalar_lea.vmem %s4, %s324
        %p326 = pneg %p134
        %p327 = pneg %p131
        %p328 = scmp.lt.s32.totalorder %s24, 2
        %s329 = scalar_select %p328, %s24, 2
        %s330 = scalar_lea.vmem %s5, %s329
        %p331 = pneg %p160
        %p332 = pneg %p157
        %p333 = pneg %p181
        %p334 = pneg %p178
        %p335 = pneg %p202
        %p336 = pneg %p199
        %p337 = pneg %p223
        %p338 = pneg %p220
        %p339 = scmp.lt.s32.totalorder %s24, 2
        %s340 = scalar_select %p339, %s24, 2
        %s341 = smul.addr %s340, 4
        %s342 = smul.addr %s341, 4
        %s343 = scalar_lea.vmem %s3, %s342
        %p344 = scmp.lt.s32.totalorder %s24, 2
        %s345 = scalar_select %p344, %s24, 2
        %s346 = smul.addr %s345, 4
        %s347 = smul.addr %s346, 4
        %s348 = scalar_lea.vmem %s4, %s347
        %p349 = scmp.lt.s32.totalorder %s24, 2
        %s350 = scalar_select %p349, %s24, 2
        %s351 = scalar_lea.vmem %s5, %s350
        %p353 = scmp.eq.s32.totalorder %s24, 0
        // Predicated region
        $region53: #{tpu_custom_call.1} parent=43 // pred_check
          %p354 = pneg %p353
        $region54: #{tpu_custom_call.1} parent=43 // pred_check_branch
          %356 = sbr.rel (%p354) target = $region56
        $region55: #{tpu_custom_call.1} parent=43 // pred_region
          %v357 = vld [vmem:[%s0] sm:$0xff]
          %v358 = vld [vmem:[%s0 + $0x8] sm:$0xff]
          %v359 = vld [vmem:[%s0 + $0x10] sm:$0xff]
          %v360 = vld [vmem:[%s0 + $0x18] sm:$0xff]
          %v361 = vld [vmem:[%s0 + $0x20] sm:$0xff]
          %v362 = vld [vmem:[%s0 + $0x28] sm:$0xff]
          %v363 = vld [vmem:[%s0 + $0x30] sm:$0xff]
          %v364 = vld [vmem:[%s0 + $0x38] sm:$0xff]
          %vm365 = vcmask 261120
          %366 = vst.msk [vmem:[%s6] sm:$0xff] %vm365, %v357
          %367 = vst.msk [vmem:[%s6 + $0x8] sm:$0xff] %vm365, %v358
          %368 = vst.msk [vmem:[%s6 + $0x10] sm:$0xff] %vm365, %v359
          %369 = vst.msk [vmem:[%s6 + $0x18] sm:$0xff] %vm365, %v360
          %370 = vst.msk [vmem:[%s6 + $0x20] sm:$0xff] %vm365, %v361
          %371 = vst.msk [vmem:[%s6 + $0x28] sm:$0xff] %vm365, %v362
          %372 = vst.msk [vmem:[%s6 + $0x30] sm:$0xff] %vm365, %v363
          %373 = vst.msk [vmem:[%s6 + $0x38] sm:$0xff] %vm365, %v364
          %v374 = vld [vmem:[#allocation2] sm:$0xff]
          %375 = vst.msk [vmem:[#allocation7] sm:$0xff] %vm365, %v374
          %v376 = vld [vmem:[#allocation5] sm:$0xff]
          %377 = vst.msk [vmem:[#allocation8] sm:$0xff] %vm365, %v376
        $region56: #{tpu_custom_call.1} parent=43 // pred_fallthru
          _
        %v378 = vld [vmem:[%s6] sm:$0xff]
        %v379 = vld [vmem:[%s6 + $0x8] sm:$0xff]
        %v380 = vld [vmem:[%s6 + $0x10] sm:$0xff]
        %v381 = vld [vmem:[%s6 + $0x18] sm:$0xff]
        %v382 = vld [vmem:[%s6 + $0x20] sm:$0xff]
        %v383 = vld [vmem:[%s6 + $0x28] sm:$0xff]
        %v384 = vld [vmem:[%s6 + $0x30] sm:$0xff]
        %v385 = vld [vmem:[%s6 + $0x38] sm:$0xff]
        %v386 = vld [vmem:[%s343] sm:$0xf]
        %v387 = vld [vmem:[%s343 + $0x4] sm:$0xf]
        %v388 = vld [vmem:[%s343 + $0x8] sm:$0xf]
        %v389 = vld [vmem:[%s343 + $0xc] sm:$0xf]
        %v390 = vld [vmem:[%s348] sm:$0xf]
        %v391 = vld [vmem:[%s348 + $0x4] sm:$0xf]
        %v392 = vld [vmem:[%s348 + $0x8] sm:$0xf]
        %v393 = vld [vmem:[%s348 + $0xc] sm:$0xf]
        %v394 = vpack.c.bf16 %v379, %v378
        %v395 = vpack.c.bf16 %v381, %v380
        %v396 = vpack.c.bf16 %v383, %v382
        %v397 = vpack.c.bf16 %v385, %v384
        %v398 = vld [vmem:[%s351] sm:$0x1]
        %v400 = vperm.slane %v398, 0
        %v406 = vunpack.c.l.b16 %v386
        %v407 = vunpack.c.l.b16 %v387
        %v408 = vunpack.c.l.b16 %v388
        %v409 = vunpack.c.l.b16 %v389
        %v410 = vpack.c.b16 %v407, %v406
        %v411 = vpack.c.b16 %v409, %v408
        %vm414 = vcmask 261120
        %v416 = vsel %vm414, %v394, 0
        %v419 = vsel %vm414, %v395, 0
        %v422 = vsel %vm414, %v396, 0
        %v425 = vsel %vm414, %v397, 0
        %427 = vmatpush.bf16.msra.mxu0 0
        %428 = vmatpush.bf16.msra.mxu0 0
        %429 = vmatpush.bf16.msra.mxu0 0
        %430 = vmatpush.bf16.msra.mxu0 0
        %431 = vmatpush.bf16.msra.mxu0 0
        %432 = vmatpush.bf16.msra.mxu0 0
        %433 = vmatpush.bf16.msra.mxu0 %v411
        %434 = vmatpush.bf16.msra.mxu0 %v410
        %435 = vmatmul.bf16.gmra.mxu0 %v416
        %v436 = vpop.f32.mrf.mxu0
        %v437 = vadd.f32 %v400, %v436
        %v438 = vpop.f32.mrf.mxu0
        %v439 = vadd.f32 %v400, %v438
        %440 = vmatmul.bf16.gmra.mxu0 %v419
        %v441 = vpop.f32.mrf.mxu0
        %v442 = vadd.f32 %v400, %v441
        %v443 = vpop.f32.mrf.mxu0
        %v444 = vadd.f32 %v400, %v443
        %445 = vmatmul.bf16.gmra.mxu0 %v422
        %v446 = vpop.f32.mrf.mxu0
        %v447 = vadd.f32 %v400, %v446
        %v448 = vpop.f32.mrf.mxu0
        %v449 = vadd.f32 %v400, %v448
        %450 = vmatmul.bf16.gmra.mxu0 %v425
        %v451 = vpop.f32.mrf.mxu0
        %v452 = vadd.f32 %v400, %v451
        %v453 = vpop.f32.mrf.mxu0
        %v454 = vadd.f32 %v400, %v453
        %455 = vdwg.mxu0
        %v456 = vld [vmem:[#allocation7] sm:$0xff]
        %v457 = vld [vmem:[#allocation8] sm:$0xff]
        %v458 = vpack.c.bf16 %v456, %v456
        %v463 = vunpack.c.l.b16 %v390
        %v464 = vunpack.c.l.b16 %v391
        %v465 = vunpack.c.l.b16 %v392
        %v466 = vunpack.c.l.b16 %v393
        %v467 = vpack.c.b16 %v464, %v463
        %v468 = vpack.c.b16 %v466, %v465
        %v472 = vsel %vm414, %v458, 0
        %474 = vmatpush.bf16.msra.mxu0 0
        %475 = vmatpush.bf16.msra.mxu0 0
        %476 = vmatpush.bf16.msra.mxu0 0
        %477 = vmatpush.bf16.msra.mxu0 0
        %478 = vmatpush.bf16.msra.mxu0 0
        %479 = vmatpush.bf16.msra.mxu0 0
        %480 = vmatpush.bf16.msra.mxu0 %v468
        %481 = vmatpush.bf16.msra.mxu0 %v467
        %482 = vmatmul.bf16.gmra.mxu0 %v472
        %v483 = vpop.f32.mrf.mxu0
        %v484 = vadd.f32 0.0, %v483
        %v485 = vpop.f32.mrf.mxu0
        %486 = vdwg.mxu0
        %v487 = vadd.f32 %v437, %v484
        %v488 = vxor.u32 %v487, 2147483648
        %v489 = vmul.f32 %v488, 1.442695
        %v490 = vpow.pop %v489
        %v491 = vadd.f32 %v490, 1.0
        %v492 = vrcp.pop %v491
        %v493 = vmul.f32 %v491, %v492
        %v494 = vsub.f32 1.0, %v493
        %v495 = vmul.f32 %v492, %v494
        %v496 = vadd.f32 %v492, %v495
        %vm497 = vweird.f32 %v491
        %vm498 = vweird.f32 %v492
        %vm499 = vmor %vm497, %vm498
        %v500 = vsel %vm499, %v492, %v496
        %v501 = vand.u32 2147483647, %v491
        %vm502 = vcmp.eq.f32.partialorder %v501, 8.507059e+37
        %v503 = vand.u32 %v491, 2147483648
        %v504 = vor.u32 1.1754944e-38, %v503
        %v505 = vsel %vm502, %v504, %v500
        %v506 = vmul.f32 1.0, %v505
        %v507 = vtanh.pop %v487
        %509 = vrot.lane.b32.xlu0 %v457, 32
        %v510 = vpop.permute.xlu0 %509
        %v512 = vmul.f32 %v506, %v510
        %514 = vrot.lane.b32.xlu0 %v507, 32
        %v515 = vpop.permute.xlu0 %514
        %v517 = vmul.f32 %v506, %v515
        %519 = vrot.lane.b32.xlu0 %v517, 32
        %v520 = vpop.permute.xlu0 %519
        %v522 = vadd.f32 %v512, %v520
        %v523 = vtanh.pop %v522
        %525 = vrot.lane.b32.xlu0 %v523, 32
        %v526 = vpop.permute.xlu0 %525
        %v528 = vmul.f32 %v506, %v526
        %530 = vrot.lane.b32.xlu0 %v378, 64
        %v531 = vpop.permute.xlu0 %530
        %v533 = vadd.f32 %v528, %v531
        %535 = vrot.lane.b32.xlu0 %v533, 64
        %v536 = vpop.permute.xlu0 %535
        %538 = vst.msk [vmem:[%s6] sm:$0xff] %vm414, %v536
        %v539 = vpack.c.bf16 %v528, %v528
        %541 = vrot.lane.b32.xlu0 %v539, 64
        %v542 = vpop.permute.xlu0 %541
        %v544 = vsel %vm414, %v542, 0
        %546 = vmatpush.bf16.msra.mxu0 0
        %547 = vmatpush.bf16.msra.mxu0 0
        %548 = vmatpush.bf16.msra.mxu0 0
        %549 = vmatpush.bf16.msra.mxu0 0
        %550 = vmatpush.bf16.msra.mxu0 0
        %551 = vmatpush.bf16.msra.mxu0 0
        %552 = vmatpush.bf16.msra.mxu0 %v468
        %553 = vmatpush.bf16.msra.mxu0 %v467
        %554 = vmatmul.bf16.gmra.mxu0 %v544
        %v555 = vpop.f32.mrf.mxu0
        %v556 = vadd.f32 0.0, %v555
        %v557 = vpop.f32.mrf.mxu0
        %558 = vdwg.mxu0
        %v559 = vadd.f32 %v439, %v556
        %v560 = vxor.u32 %v559, 2147483648
        %v561 = vmul.f32 %v560, 1.442695
        %v562 = vpow.pop %v561
        %v563 = vadd.f32 %v562, 1.0
        %v564 = vrcp.pop %v563
        %v565 = vmul.f32 %v563, %v564
        %v566 = vsub.f32 1.0, %v565
        %v567 = vmul.f32 %v564, %v566
        %v568 = vadd.f32 %v564, %v567
        %vm569 = vweird.f32 %v563
        %vm570 = vweird.f32 %v564
        %vm571 = vmor %vm569, %vm570
        %v572 = vsel %vm571, %v564, %v568
        %v573 = vand.u32 2147483647, %v563
        %vm574 = vcmp.eq.f32.partialorder %v573, 8.507059e+37
        %v575 = vand.u32 %v563, 2147483648
        %v576 = vor.u32 1.1754944e-38, %v575
        %v577 = vsel %vm574, %v576, %v572
        %v578 = vmul.f32 1.0, %v577
        %v579 = vtanh.pop %v559
        %v580 = vmul.f32 %v578, %v522
        %582 = vrot.lane.b32.xlu0 %v579, 32
        %v583 = vpop.permute.xlu0 %582
        %v585 = vmul.f32 %v578, %v583
        %587 = vrot.lane.b32.xlu0 %v585, 32
        %v588 = vpop.permute.xlu0 %587
        %v590 = vadd.f32 %v580, %v588
        %v591 = vtanh.pop %v590
        %593 = vrot.lane.b32.xlu0 %v591, 32
        %v594 = vpop.permute.xlu0 %593
        %v596 = vmul.f32 %v578, %v594
        %598 = vrot.lane.b32.xlu0 %v379, 64
        %v599 = vpop.permute.xlu0 %598
        %v601 = vadd.f32 %v596, %v599
        %603 = vrot.lane.b32.xlu0 %v601, 64
        %v604 = vpop.permute.xlu0 %603
        %606 = vst.msk [vmem:[%s6 + $0x8] sm:$0xff] %vm414, %v604
        %v607 = vpack.c.bf16 %v596, %v596
        %609 = vrot.lane.b32.xlu0 %v607, 64
        %v610 = vpop.permute.xlu0 %609
        %v612 = vsel %vm414, %v610, 0
        %614 = vmatpush.bf16.msra.mxu0 0
        %615 = vmatpush.bf16.msra.mxu0 0
        %616 = vmatpush.bf16.msra.mxu0 0
        %617 = vmatpush.bf16.msra.mxu0 0
        %618 = vmatpush.bf16.msra.mxu0 0
        %619 = vmatpush.bf16.msra.mxu0 0
        %620 = vmatpush.bf16.msra.mxu0 %v468
        %621 = vmatpush.bf16.msra.mxu0 %v467
        %622 = vmatmul.bf16.gmra.mxu0 %v612
        %v623 = vpop.f32.mrf.mxu0
        %v624 = vadd.f32 0.0, %v623
        %v625 = vpop.f32.mrf.mxu0
        %626 = vdwg.mxu0
        %v627 = vadd.f32 %v442, %v624
        %v628 = vxor.u32 %v627, 2147483648
        %v629 = vmul.f32 %v628, 1.442695
        %v630 = vpow.pop %v629
        %v631 = vadd.f32 %v630, 1.0
        %v632 = vrcp.pop %v631
        %v633 = vmul.f32 %v631, %v632
        %v634 = vsub.f32 1.0, %v633
        %v635 = vmul.f32 %v632, %v634
        %v636 = vadd.f32 %v632, %v635
        %vm637 = vweird.f32 %v631
        %vm638 = vweird.f32 %v632
        %vm639 = vmor %vm637, %vm638
        %v640 = vsel %vm639, %v632, %v636
        %v641 = vand.u32 2147483647, %v631
        %vm642 = vcmp.eq.f32.partialorder %v641, 8.507059e+37
        %v643 = vand.u32 %v631, 2147483648
        %v644 = vor.u32 1.1754944e-38, %v643
        %v645 = vsel %vm642, %v644, %v640
        %v646 = vmul.f32 1.0, %v645
        %v647 = vtanh.pop %v627
        %v648 = vmul.f32 %v646, %v590
        %650 = vrot.lane.b32.xlu0 %v647, 32
        %v651 = vpop.permute.xlu0 %650
        %v653 = vmul.f32 %v646, %v651
        %655 = vrot.lane.b32.xlu0 %v653, 32
        %v656 = vpop.permute.xlu0 %655
        %v658 = vadd.f32 %v648, %v656
        %v659 = vtanh.pop %v658
        %661 = vrot.lane.b32.xlu0 %v659, 32
        %v662 = vpop.permute.xlu0 %661
        %v664 = vmul.f32 %v646, %v662
        %666 = vrot.lane.b32.xlu0 %v380, 64
        %v667 = vpop.permute.xlu0 %666
        %v669 = vadd.f32 %v664, %v667
        %671 = vrot.lane.b32.xlu0 %v669, 64
        %v672 = vpop.permute.xlu0 %671
        %674 = vst.msk [vmem:[%s6 + $0x10] sm:$0xff] %vm414, %v672
        %v675 = vpack.c.bf16 %v664, %v664
        %677 = vrot.lane.b32.xlu0 %v675, 64
        %v678 = vpop.permute.xlu0 %677
        %v680 = vsel %vm414, %v678, 0
        %682 = vmatpush.bf16.msra.mxu0 0
        %683 = vmatpush.bf16.msra.mxu0 0
        %684 = vmatpush.bf16.msra.mxu0 0
        %685 = vmatpush.bf16.msra.mxu0 0
        %686 = vmatpush.bf16.msra.mxu0 0
        %687 = vmatpush.bf16.msra.mxu0 0
        %688 = vmatpush.bf16.msra.mxu0 %v468
        %689 = vmatpush.bf16.msra.mxu0 %v467
        %690 = vmatmul.bf16.gmra.mxu0 %v680
        %v691 = vpop.f32.mrf.mxu0
        %v692 = vadd.f32 0.0, %v691
        %v693 = vpop.f32.mrf.mxu0
        %694 = vdwg.mxu0
        %v695 = vadd.f32 %v444, %v692
        %v696 = vxor.u32 %v695, 2147483648
        %v697 = vmul.f32 %v696, 1.442695
        %v698 = vpow.pop %v697
        %v699 = vadd.f32 %v698, 1.0
        %v700 = vrcp.pop %v699
        %v701 = vmul.f32 %v699, %v700
        %v702 = vsub.f32 1.0, %v701
        %v703 = vmul.f32 %v700, %v702
        %v704 = vadd.f32 %v700, %v703
        %vm705 = vweird.f32 %v699
        %vm706 = vweird.f32 %v700
        %vm707 = vmor %vm705, %vm706
        %v708 = vsel %vm707, %v700, %v704
        %v709 = vand.u32 2147483647, %v699
        %vm710 = vcmp.eq.f32.partialorder %v709, 8.507059e+37
        %v711 = vand.u32 %v699, 2147483648
        %v712 = vor.u32 1.1754944e-38, %v711
        %v713 = vsel %vm710, %v712, %v708
        %v714 = vmul.f32 1.0, %v713
        %v715 = vtanh.pop %v695
        %v716 = vmul.f32 %v714, %v658
        %718 = vrot.lane.b32.xlu0 %v715, 32
        %v719 = vpop.permute.xlu0 %718
        %v721 = vmul.f32 %v714, %v719
        %723 = vrot.lane.b32.xlu0 %v721, 32
        %v724 = vpop.permute.xlu0 %723
        %v726 = vadd.f32 %v716, %v724
        %v727 = vtanh.pop %v726
        %729 = vrot.lane.b32.xlu0 %v727, 32
        %v730 = vpop.permute.xlu0 %729
        %v732 = vmul.f32 %v714, %v730
        %734 = vrot.lane.b32.xlu0 %v381, 64
        %v735 = vpop.permute.xlu0 %734
        %v737 = vadd.f32 %v732, %v735
        %739 = vrot.lane.b32.xlu0 %v737, 64
        %v740 = vpop.permute.xlu0 %739
        %742 = vst.msk [vmem:[%s6 + $0x18] sm:$0xff] %vm414, %v740
        %v743 = vpack.c.bf16 %v732, %v732
        %745 = vrot.lane.b32.xlu0 %v743, 64
        %v746 = vpop.permute.xlu0 %745
        %v748 = vsel %vm414, %v746, 0
        %750 = vmatpush.bf16.msra.mxu0 0
        %751 = vmatpush.bf16.msra.mxu0 0
        %752 = vmatpush.bf16.msra.mxu0 0
        %753 = vmatpush.bf16.msra.mxu0 0
        %754 = vmatpush.bf16.msra.mxu0 0
        %755 = vmatpush.bf16.msra.mxu0 0
        %756 = vmatpush.bf16.msra.mxu0 %v468
        %757 = vmatpush.bf16.msra.mxu0 %v467
        %758 = vmatmul.bf16.gmra.mxu0 %v748
        %v759 = vpop.f32.mrf.mxu0
        %v760 = vadd.f32 0.0, %v759
        %v761 = vpop.f32.mrf.mxu0
        %762 = vdwg.mxu0
        %v763 = vadd.f32 %v447, %v760
        %v764 = vxor.u32 %v763, 2147483648
        %v765 = vmul.f32 %v764, 1.442695
        %v766 = vpow.pop %v765
        %v767 = vadd.f32 %v766, 1.0
        %v768 = vrcp.pop %v767
        %v769 = vmul.f32 %v767, %v768
        %v770 = vsub.f32 1.0, %v769
        %v771 = vmul.f32 %v768, %v770
        %v772 = vadd.f32 %v768, %v771
        %vm773 = vweird.f32 %v767
        %vm774 = vweird.f32 %v768
        %vm775 = vmor %vm773, %vm774
        %v776 = vsel %vm775, %v768, %v772
        %v777 = vand.u32 2147483647, %v767
        %vm778 = vcmp.eq.f32.partialorder %v777, 8.507059e+37
        %v779 = vand.u32 %v767, 2147483648
        %v780 = vor.u32 1.1754944e-38, %v779
        %v781 = vsel %vm778, %v780, %v776
        %v782 = vmul.f32 1.0, %v781
        %v783 = vtanh.pop %v763
        %v784 = vmul.f32 %v782, %v726
        %786 = vrot.lane.b32.xlu0 %v783, 32
        %v787 = vpop.permute.xlu0 %786
        %v789 = vmul.f32 %v782, %v787
        %791 = vrot.lane.b32.xlu0 %v789, 32
        %v792 = vpop.permute.xlu0 %791
        %v794 = vadd.f32 %v784, %v792
        %v795 = vtanh.pop %v794
        %797 = vrot.lane.b32.xlu0 %v795, 32
        %v798 = vpop.permute.xlu0 %797
        %v800 = vmul.f32 %v782, %v798
        %802 = vrot.lane.b32.xlu0 %v382, 64
        %v803 = vpop.permute.xlu0 %802
        %v805 = vadd.f32 %v800, %v803
        %807 = vrot.lane.b32.xlu0 %v805, 64
        %v808 = vpop.permute.xlu0 %807
        %810 = vst.msk [vmem:[%s6 + $0x20] sm:$0xff] %vm414, %v808
        %v811 = vpack.c.bf16 %v800, %v800
        %813 = vrot.lane.b32.xlu0 %v811, 64
        %v814 = vpop.permute.xlu0 %813
        %v816 = vsel %vm414, %v814, 0
        %818 = vmatpush.bf16.msra.mxu0 0
        %819 = vmatpush.bf16.msra.mxu0 0
        %820 = vmatpush.bf16.msra.mxu0 0
        %821 = vmatpush.bf16.msra.mxu0 0
        %822 = vmatpush.bf16.msra.mxu0 0
        %823 = vmatpush.bf16.msra.mxu0 0
        %824 = vmatpush.bf16.msra.mxu0 %v468
        %825 = vmatpush.bf16.msra.mxu0 %v467
        %826 = vmatmul.bf16.gmra.mxu0 %v816
        %v827 = vpop.f32.mrf.mxu0
        %v828 = vadd.f32 0.0, %v827
        %v829 = vpop.f32.mrf.mxu0
        %830 = vdwg.mxu0
        %v831 = vadd.f32 %v449, %v828
        %v832 = vxor.u32 %v831, 2147483648
        %v833 = vmul.f32 %v832, 1.442695
        %v834 = vpow.pop %v833
        %v835 = vadd.f32 %v834, 1.0
        %v836 = vrcp.pop %v835
        %v837 = vmul.f32 %v835, %v836
        %v838 = vsub.f32 1.0, %v837
        %v839 = vmul.f32 %v836, %v838
        %v840 = vadd.f32 %v836, %v839
        %vm841 = vweird.f32 %v835
        %vm842 = vweird.f32 %v836
        %vm843 = vmor %vm841, %vm842
        %v844 = vsel %vm843, %v836, %v840
        %v845 = vand.u32 2147483647, %v835
        %vm846 = vcmp.eq.f32.partialorder %v845, 8.507059e+37
        %v847 = vand.u32 %v835, 2147483648
        %v848 = vor.u32 1.1754944e-38, %v847
        %v849 = vsel %vm846, %v848, %v844
        %v850 = vmul.f32 1.0, %v849
        %v851 = vtanh.pop %v831
        %v852 = vmul.f32 %v850, %v794
        %854 = vrot.lane.b32.xlu0 %v851, 32
        %v855 = vpop.permute.xlu0 %854
        %v857 = vmul.f32 %v850, %v855
        %859 = vrot.lane.b32.xlu0 %v857, 32
        %v860 = vpop.permute.xlu0 %859
        %v862 = vadd.f32 %v852, %v860
        %v863 = vtanh.pop %v862
        %865 = vrot.lane.b32.xlu0 %v863, 32
        %v866 = vpop.permute.xlu0 %865
        %v868 = vmul.f32 %v850, %v866
        %870 = vrot.lane.b32.xlu0 %v383, 64
        %v871 = vpop.permute.xlu0 %870
        %v873 = vadd.f32 %v868, %v871
        %875 = vrot.lane.b32.xlu0 %v873, 64
        %v876 = vpop.permute.xlu0 %875
        %878 = vst.msk [vmem:[%s6 + $0x28] sm:$0xff] %vm414, %v876
        %v879 = vpack.c.bf16 %v868, %v868
        %881 = vrot.lane.b32.xlu0 %v879, 64
        %v882 = vpop.permute.xlu0 %881
        %v884 = vsel %vm414, %v882, 0
        %886 = vmatpush.bf16.msra.mxu0 0
        %887 = vmatpush.bf16.msra.mxu0 0
        %888 = vmatpush.bf16.msra.mxu0 0
        %889 = vmatpush.bf16.msra.mxu0 0
        %890 = vmatpush.bf16.msra.mxu0 0
        %891 = vmatpush.bf16.msra.mxu0 0
        %892 = vmatpush.bf16.msra.mxu0 %v468
        %893 = vmatpush.bf16.msra.mxu0 %v467
        %894 = vmatmul.bf16.gmra.mxu0 %v884
        %v895 = vpop.f32.mrf.mxu0
        %v896 = vadd.f32 0.0, %v895
        %v897 = vpop.f32.mrf.mxu0
        %898 = vdwg.mxu0
        %v899 = vadd.f32 %v452, %v896
        %v900 = vxor.u32 %v899, 2147483648
        %v901 = vmul.f32 %v900, 1.442695
        %v902 = vpow.pop %v901
        %v903 = vadd.f32 %v902, 1.0
        %v904 = vrcp.pop %v903
        %v905 = vmul.f32 %v903, %v904
        %v906 = vsub.f32 1.0, %v905
        %v907 = vmul.f32 %v904, %v906
        %v908 = vadd.f32 %v904, %v907
        %vm909 = vweird.f32 %v903
        %vm910 = vweird.f32 %v904
        %vm911 = vmor %vm909, %vm910
        %v912 = vsel %vm911, %v904, %v908
        %v913 = vand.u32 2147483647, %v903
        %vm914 = vcmp.eq.f32.partialorder %v913, 8.507059e+37
        %v915 = vand.u32 %v903, 2147483648
        %v916 = vor.u32 1.1754944e-38, %v915
        %v917 = vsel %vm914, %v916, %v912
        %v918 = vmul.f32 1.0, %v917
        %v919 = vtanh.pop %v899
        %v920 = vmul.f32 %v918, %v862
        %922 = vrot.lane.b32.xlu0 %v919, 32
        %v923 = vpop.permute.xlu0 %922
        %v925 = vmul.f32 %v918, %v923
        %927 = vrot.lane.b32.xlu0 %v925, 32
        %v928 = vpop.permute.xlu0 %927
        %v930 = vadd.f32 %v920, %v928
        %v931 = vtanh.pop %v930
        %933 = vrot.lane.b32.xlu0 %v931, 32
        %v934 = vpop.permute.xlu0 %933
        %v936 = vmul.f32 %v918, %v934
        %938 = vrot.lane.b32.xlu0 %v384, 64
        %v939 = vpop.permute.xlu0 %938
        %v941 = vadd.f32 %v936, %v939
        %943 = vrot.lane.b32.xlu0 %v941, 64
        %v944 = vpop.permute.xlu0 %943
        %946 = vst.msk [vmem:[%s6 + $0x30] sm:$0xff] %vm414, %v944
        %v947 = vpack.c.bf16 %v936, %v936
        %949 = vrot.lane.b32.xlu0 %v947, 64
        %v950 = vpop.permute.xlu0 %949
        %v952 = vsel %vm414, %v950, 0
        %954 = vmatpush.bf16.msra.mxu0 0
        %955 = vmatpush.bf16.msra.mxu0 0
        %956 = vmatpush.bf16.msra.mxu0 0
        %957 = vmatpush.bf16.msra.mxu0 0
        %958 = vmatpush.bf16.msra.mxu0 0
        %959 = vmatpush.bf16.msra.mxu0 0
        %960 = vmatpush.bf16.msra.mxu0 %v468
        %961 = vmatpush.bf16.msra.mxu0 %v467
        %962 = vmatmul.bf16.gmra.mxu0 %v952
        %v963 = vpop.f32.mrf.mxu0
        %v964 = vadd.f32 0.0, %v963
        %v965 = vpop.f32.mrf.mxu0
        %966 = vdwg.mxu0
        %v967 = vadd.f32 %v454, %v964
        %v968 = vxor.u32 %v967, 2147483648
        %v969 = vmul.f32 %v968, 1.442695
        %v970 = vpow.pop %v969
        %v971 = vadd.f32 %v970, 1.0
        %v972 = vrcp.pop %v971
        %v973 = vmul.f32 %v971, %v972
        %v974 = vsub.f32 1.0, %v973
        %v975 = vmul.f32 %v972, %v974
        %v976 = vadd.f32 %v972, %v975
        %vm977 = vweird.f32 %v971
        %vm978 = vweird.f32 %v972
        %vm979 = vmor %vm977, %vm978
        %v980 = vsel %vm979, %v972, %v976
        %v981 = vand.u32 2147483647, %v971
        %vm982 = vcmp.eq.f32.partialorder %v981, 8.507059e+37
        %v983 = vand.u32 %v971, 2147483648
        %v984 = vor.u32 1.1754944e-38, %v983
        %v985 = vsel %vm982, %v984, %v980
        %v986 = vmul.f32 1.0, %v985
        %v987 = vtanh.pop %v967
        %v988 = vmul.f32 %v986, %v930
        %990 = vrot.lane.b32.xlu0 %v987, 32
        %v991 = vpop.permute.xlu0 %990
        %v993 = vmul.f32 %v986, %v991
        %995 = vrot.lane.b32.xlu0 %v993, 32
        %v996 = vpop.permute.xlu0 %995
        %v998 = vadd.f32 %v988, %v996
        %v999 = vtanh.pop %v998
        %1001 = vrot.lane.b32.xlu0 %v999, 32
        %v1002 = vpop.permute.xlu0 %1001
        %v1004 = vmul.f32 %v986, %v1002
        %1006 = vrot.lane.b32.xlu0 %v385, 64
        %v1007 = vpop.permute.xlu0 %1006
        %v1009 = vadd.f32 %v1004, %v1007
        %1011 = vrot.lane.b32.xlu0 %v1009, 64
        %v1012 = vpop.permute.xlu0 %1011
        %1014 = vst.msk [vmem:[%s6 + $0x38] sm:$0xff] %vm414, %v1012
        %1016 = vrot.lane.b32.xlu0 %v1004, 64
        %v1017 = vpop.permute.xlu0 %1016
        %1019 = vst.msk [vmem:[#allocation7] sm:$0xff] %vm414, %v1017
        %1021 = vrot.lane.b32.xlu0 %v998, 96
        %v1022 = vpop.permute.xlu0 %1021
        %1024 = vst.msk [vmem:[#allocation8] sm:$0xff] %vm414, %v1022
        // Predicated region
        $region57: #{tpu_custom_call.1} parent=43 // pred_check
          %p1025 = pneg %p178
        $region58: #{tpu_custom_call.1} parent=43 // pred_check_branch
          %1027 = sbr.rel (%p1025) target = $region60
        $region59: #{tpu_custom_call.1} parent=43 // pred_region
          _
        $region60: #{tpu_custom_call.1} parent=43 // pred_fallthru
          _
        // Predicated region
        $region61: #{tpu_custom_call.1} parent=43 // pred_check
          %p1028 = pneg %p199
        $region62: #{tpu_custom_call.1} parent=43 // pred_check_branch
          %1030 = sbr.rel (%p1028) target = $region64
        $region63: #{tpu_custom_call.1} parent=43 // pred_region
          %1032 = vsyncadd [#allocation4], 0
          %s1034 = sshll.u32 [#allocation7], 4
          %s1035 = int_to_ptr.vmem [resolvable:$true] %s1034
          %s1036 = sshll.u32 %s7, 4
          %s1037 = int_to_ptr.hbm [resolvable:$true] %s1036
          %1039 = dma.vmem_to_hbm [thread:$0]  %s1035, 128, %s1037, [#allocation4]
        $region64: #{tpu_custom_call.1} parent=43 // pred_fallthru
          _
        // Predicated region
        $region65: #{tpu_custom_call.1} parent=43 // pred_check
          %p1040 = pneg %p220
        $region66: #{tpu_custom_call.1} parent=43 // pred_check_branch
          %1042 = sbr.rel (%p1040) target = $region68
        $region67: #{tpu_custom_call.1} parent=43 // pred_region
          %1044 = vsyncadd [#allocation9], 0
          %s1046 = sshll.u32 [#allocation8], 4
          %s1047 = int_to_ptr.vmem [resolvable:$true] %s1046
          %s1048 = sshll.u32 %s8, 4
          %s1049 = int_to_ptr.hbm [resolvable:$true] %s1048
          %1051 = dma.vmem_to_hbm [thread:$0]  %s1047, 128, %s1049, [#allocation9]
        $region68: #{tpu_custom_call.1} parent=43 // pred_fallthru
          _
        // Predicated region
        $region69: #{tpu_custom_call.1} parent=43 // pred_check
          %p1052 = pneg %p178
        $region70: #{tpu_custom_call.1} parent=43 // pred_check_branch
          %1054 = sbr.rel (%p1052) target = $region72
        $region71: #{tpu_custom_call.1} parent=43 // pred_region
          _
        $region72: #{tpu_custom_call.1} parent=43 // pred_fallthru
          _
        // Predicated region
        $region73: #{tpu_custom_call.1} parent=43 // pred_check
          %p1055 = pneg %p199
        $region74: #{tpu_custom_call.1} parent=43 // pred_check_branch
          %1057 = sbr.rel (%p1055) target = $region76
        $region75: #{tpu_custom_call.1} parent=43 // pred_region
          %1059 = dma.done [#allocation4], 128
        $region76: #{tpu_custom_call.1} parent=43 // pred_fallthru
          _
        // Predicated region
        $region77: #{tpu_custom_call.1} parent=43 // pred_check
          %p1060 = pneg %p220
        $region78: #{tpu_custom_call.1} parent=43 // pred_check_branch
          %1062 = sbr.rel (%p1060) target = $region80
        $region79: #{tpu_custom_call.1} parent=43 // pred_region
          %1064 = dma.done [#allocation9], 128
        $region80: #{tpu_custom_call.1} parent=43 // pred_fallthru
          _
      $region44: #{tpu_custom_call.1} parent=5 // pred_fallthru
        _
      %p1065 = scmp.le.s32.totalorder 2, %s19
      // Predicated region
      $region81: #{tpu_custom_call.1} parent=5 // pred_check
        %p1066 = pneg %p1065
      $region82: #{tpu_custom_call.1} parent=5 // pred_check_branch
        %1068 = sbr.rel (%p1066) target = $region84
      $region83: #{tpu_custom_call.1} parent=5 // pred_region
        %s1069 = ssub.s32 %s19, 2
      $region84: #{tpu_custom_call.1} parent=5 // pred_fallthru
        _
    $region6: #{tpu_custom_call.1} parent=1 // loop_footer
      %s23 = sadd.s32 1, %s19
    $region7: #{tpu_custom_call.1} parent=1 // loop_footer_branch
      %18 = sbr.rel target = $region3
    $region8: #{tpu_custom_call.1} parent=1 // loop_exit
      _
    %1070 = vsyncpa [#allocation3], 1
    %s1071 = scalar_lea.sflag [#allocation3], 1
    %1072 = vsyncpa %s1071, 1
    %1073 = vsyncpa [#allocation6], 1
    %1074 = vsyncpa [#allocation4], 1
    %s1075 = scalar_lea.sflag [#allocation4], 1
    %1076 = vsyncpa %s1075, 1
    %1077 = vsyncpa [#allocation9], 1

</llo_original>
